<compile_context>
chip_gen: v5e
topology: v5e:2x2
jax: 0.10.0
libtpu: 0.0.40
codegen_flags: <defaults>
</compile_context>

<pallas_src>
import numpy as np
import jax
import jax.numpy as jnp
from jax.experimental import pallas as pl
from jax.experimental.pallas import tpu as pltpu

_COMPUTE_DTYPE = jnp.bfloat16   # MXU input dtype (accumulation stays f32)

# Fixed LeNet geometry (3x32x32 input, as implied by the 16*5*5 flatten).
_H = _W = 32
_C_IN = 3
_K = 5
_P1 = 14            # pooled conv1 spatial size
_CONV2_OH = 10      # conv2 rows/cols before pooling
_P2 = 5             # pooled conv2 spatial size
_LANES = 128
_KROWS = _K * _LANES        # 640: rows of the Toeplitz weights / fc1 weight


# ----------------------------------------------------------------------------
# The single fused kernel (runs once per batch element via grid=(B,)).
# ----------------------------------------------------------------------------
def _lenet_kernel(xe_ref, xo_ref, t1_ref, b1_ref, t2_ref, b2_ref,
                  w1_ref, fb1_ref, w2_ref, fb2_ref, w3_ref, fb3_ref, o_ref):
    xe = xe_ref[0]                      # [16, 128] input rows h = 0,2,4,...
    xo = xo_ref[0]                      # [16, 128] input rows h = 1,3,5,...
    xpar = (xe, xo)

    # ---- conv1 (5x5, 3->6) + bias + ReLU + 2x2 max-pool -> y1 [14, 128] ----
    # y1[i, oc*14 + j] = pooled feature (channel oc, row i, col j).
    t1 = t1_ref[...]                    # [640, 256]: (u, c, w) x (dj, oc, j)
    y1pre = None
    for di in range(2):                 # pooling row tap
        parts = []
        for u in range(_K):             # kernel row; needs input row 2i+di+u
            r = di + u
            src = xpar[r % 2]
            parts.append(src[(r // 2):(r // 2) + _P1, :])          # [14, 128]
        lhs = jnp.concatenate(parts, axis=1).astype(_COMPUTE_DTYPE)  # [14, 640]
        z = jnp.dot(lhs, t1, preferred_element_type=jnp.float32)     # [14, 256]
        m = jnp.maximum(z[:, :_LANES], z[:, _LANES:])   # max over column tap
        y1pre = m if y1pre is None else jnp.maximum(y1pre, m)
    y1 = jnp.maximum(y1pre + b1_ref[...], 0.0)                       # [14, 128]

    # ---- conv2 (5x5, 6->16) + bias + ReLU + 2x2 max-pool -> y2 [5, 128] ----
    t2 = t2_ref[...]                    # [640, 256]: (u, c1, q) x (dj, oc2, j2)
    parts = [y1[u:u + _CONV2_OH, :] for u in range(_K)]              # 5x[10,128]
    lhs2 = jnp.concatenate(parts, axis=1).astype(_COMPUTE_DTYPE)     # [10, 640]
    z2 = jnp.dot(lhs2, t2, preferred_element_type=jnp.float32)       # [10, 256]
    zp = jnp.maximum(z2[:, :_LANES], z2[:, _LANES:])                 # [10, 128]
    ev = jnp.concatenate([zp[2 * k:2 * k + 1, :] for k in range(_P2)], axis=0)
    od = jnp.concatenate([zp[2 * k + 1:2 * k + 2, :] for k in range(_P2)], axis=0)
    y2 = jnp.maximum(jnp.maximum(ev, od) + b2_ref[...], 0.0)         # [5, 128]

    # ---- flatten: fc1 weight rows were pre-permuted to this exact order ----
    feat = jnp.concatenate([y2[i:i + 1, :] for i in range(_P2)], axis=1)
    feat = feat.astype(_COMPUTE_DTYPE)                               # [1, 640]

    # ---- fc1 -> relu -> fc2 -> relu -> fc3 ---------------------------------
    h = jnp.dot(feat, w1_ref[...], preferred_element_type=jnp.float32) + fb1_ref[...]
    h = jnp.maximum(h, 0.0).astype(_COMPUTE_DTYPE)
    h = jnp.dot(h, w2_ref[...], preferred_element_type=jnp.float32) + fb2_ref[...]
    h = jnp.maximum(h, 0.0).astype(_COMPUTE_DTYPE)
    out = jnp.dot(h, w3_ref[...], preferred_element_type=jnp.float32) + fb3_ref[...]
    o_ref[0] = out                                                   # [1, 128]


def _lenet_pallas(x_even, x_odd, prep):
    B = x_even.shape[0]

    def full(shape):
        return pl.BlockSpec(shape, lambda i: (0,) * len(shape))

    return pl.pallas_call(
        _lenet_kernel,
        out_shape=jax.ShapeDtypeStruct((B, 1, _LANES), jnp.float32),
        grid=(B,),
        in_specs=[
            pl.BlockSpec((1, _H // 2, _LANES), lambda i: (i, 0, 0)),   # x_even
            pl.BlockSpec((1, _H // 2, _LANES), lambda i: (i, 0, 0)),   # x_odd
            full((_KROWS, 2 * _LANES)), full((1, _LANES)),             # conv1
            full((_KROWS, 2 * _LANES)), full((1, _LANES)),             # conv2
            full((_KROWS, _LANES)), full((1, _LANES)),                 # fc1
            full((_LANES, _LANES)), full((1, _LANES)),                 # fc2
            full((_LANES, _LANES)), full((1, _LANES)),                 # fc3
        ],
        out_specs=pl.BlockSpec((1, 1, _LANES), lambda i: (i, 0, 0)),
        compiler_params=pltpu.CompilerParams(
            dimension_semantics=("parallel",)),
    )(x_even, x_odd,
      prep["t1"], prep["b1"], prep["t2"], prep["b2"],
      prep["w1"], prep["fb1"], prep["w2"], prep["fb2"],
      prep["w3"], prep["fb3"])


# ----------------------------------------------------------------------------
# Parameters: synthetic init matching Net.__init__, one-time weight staging.
# ----------------------------------------------------------------------------
def init_params(key):
    """Deterministic synthetic parameters matching Net.__init__ shapes."""
    ks = jax.random.split(key, 10)

    def u(k, shape, fan_in):
        bound = 1.0 / jnp.sqrt(float(fan_in))
        return jax.random.uniform(k, shape, jnp.float32, -bound, bound)

    return {
        "conv1_w": u(ks[0], (6, 3, 5, 5), 3 * 5 * 5),
        "conv1_b": u(ks[1], (6,), 3 * 5 * 5),
        "conv2_w": u(ks[2], (16, 6, 5, 5), 6 * 5 * 5),
        "conv2_b": u(ks[3], (16,), 6 * 5 * 5),
        "fc1_w": u(ks[4], (400, 120), 400),
        "fc1_b": u(ks[5], (120,), 400),
        "fc2_w": u(ks[6], (120, 84), 120),
        "fc2_b": u(ks[7], (84,), 120),
        "fc3_w": u(ks[8], (84, 10), 84),
        "fc3_b": u(ks[9], (10,), 84),
    }


def prepare_params(params):
    """One-time staging (off the hot path): unroll both 5x5 convs into banded
    'row-Toeplitz' matrices (kernel taps + pooling column tap live in the
    weights), permute fc1 rows to the kernel's flatten order, zero-pad all
    lane dims to 128, and cast the large matrices to bf16."""
    w1 = np.asarray(params["conv1_w"], np.float32)
    b1 = np.asarray(params["conv1_b"], np.float32)
    w2 = np.asarray(params["conv2_w"], np.float32)
    b2 = np.asarray(params["conv2_b"], np.float32)
    fc1w = np.asarray(params["fc1_w"], np.float32)
    fc1b = np.asarray(params["fc1_b"], np.float32)
    fc2w = np.asarray(params["fc2_w"], np.float32)
    fc2b = np.asarray(params["fc2_b"], np.float32)
    fc3w = np.asarray(params["fc3_w"], np.float32)
    fc3b = np.asarray(params["fc3_b"], np.float32)

    # conv1: row = u*128 + c*32 + w_in, col = dj*128 + oc*14 + j
    #   (output col j of pooled row i pools conv cols 2j+dj, conv col = 2j+dj+v)
    t1 = np.zeros((_KROWS, 2 * _LANES), np.float32)
    for u in range(5):
        for c in range(3):
            for v in range(5):
                for oc in range(6):
                    for j in range(14):
                        for dj in range(2):
                            t1[u * 128 + c * 32 + (2 * j + dj + v),
                               dj * 128 + oc * 14 + j] = w1[oc, c, u, v]
    b1row = np.zeros((1, _LANES), np.float32)
    for oc in range(6):
        b1row[0, oc * 14:(oc + 1) * 14] = b1[oc]

    # conv2: row = u*128 + c1*14 + q, col = dj*128 + oc2*5 + j2
    t2 = np.zeros((_KROWS, 2 * _LANES), np.float32)
    for u in range(5):
        for c1 in range(6):
            for v in range(5):
                for oc2 in range(16):
                    for j2 in range(5):
                        for dj in range(2):
                            t2[u * 128 + c1 * 14 + (2 * j2 + dj + v),
                               dj * 128 + oc2 * 5 + j2] = w2[oc2, c1, u, v]
    b2row = np.zeros((1, _LANES), np.float32)
    for oc2 in range(16):
        b2row[0, oc2 * 5:(oc2 + 1) * 5] = b2[oc2]

    # fc1: permute rows from PyTorch's NCHW flatten (c,h,w) to the kernel's
    # feat layout (row i2)*128 + (c2*5 + j2); pad lanes 120 -> 128.
    w1cat = np.zeros((_KROWS, _LANES), np.float32)
    for i2 in range(5):
        for c2 in range(16):
            for j2 in range(5):
                w1cat[i2 * 128 + c2 * 5 + j2, :120] = fc1w[c2 * 25 + i2 * 5 + j2, :]
    fb1 = np.zeros((1, _LANES), np.float32)
    fb1[0, :120] = fc1b
    w2p = np.zeros((_LANES, _LANES), np.float32)
    w2p[:120, :84] = fc2w
    fb2 = np.zeros((1, _LANES), np.float32)
    fb2[0, :84] = fc2b
    w3p = np.zeros((_LANES, _LANES), np.float32)
    w3p[:84, :10] = fc3w
    fb3 = np.zeros((1, _LANES), np.float32)
    fb3[0, :10] = fc3b

    cd = _COMPUTE_DTYPE
    return {
        "t1": jnp.asarray(t1, cd), "b1": jnp.asarray(b1row),
        "t2": jnp.asarray(t2, cd), "b2": jnp.asarray(b2row),
        "w1": jnp.asarray(w1cat, cd), "fb1": jnp.asarray(fb1),
        "w2": jnp.asarray(w2p, cd), "fb2": jnp.asarray(fb2),
        "w3": jnp.asarray(w3p, cd), "fb3": jnp.asarray(fb3),
    }


@jax.jit
def net_forward(x_nchw, prep):
    B, C, H, W = x_nchw.shape
    assert (C, H, W) == (_C_IN, _H, _W), "Net expects 3x32x32 inputs"
    # Row view: xr[b, h, c*32 + w]; pad lanes 96 -> 128; split rows by parity
    # so conv1's pooling row taps become contiguous sublane slices in-kernel.
    xr = jnp.transpose(x_nchw.astype(jnp.float32), (0, 2, 1, 3))
    xr = xr.reshape(B, _H, _C_IN * _W)
    xr = jnp.pad(xr, ((0, 0), (0, 0), (0, _LANES - _C_IN * _W)))
    x_even = xr[:, 0::2, :]            # [B, 16, 128]
    x_odd = xr[:, 1::2, :]             # [B, 16, 128]
    out = _lenet_pallas(x_even, x_odd, prep)     # [B, 1, 128]
    return out[:, 0, :10]


if __name__ == "__main__":
    key = jax.random.PRNGKey(0)
    k_params, k_input = jax.random.split(key)

    params = init_params(k_params)
    prep = prepare_params(params)
    # Net implies 3x32x32 inputs (16*5*5 flatten after two conv5+pool2 stages).
    x = jax.random.normal(k_input, (2, 3, 32, 32), dtype=jnp.float32)

    out = net_forward(x, prep)
    out = jax.block_until_ready(out)
    assert out.shape == (2, 10) and out.dtype == jnp.float32
    print("KERNEL_OK")
</pallas_src>

<mosaic_0001>
module attributes {stable_mosaic.version = 11 : i64} {
  func.func @_lenet_kernel(%arg0: i32, %arg1: memref<1x16x128xf32, #tpu.memory_space<vmem>>, %arg2: memref<1x16x128xf32, #tpu.memory_space<vmem>>, %arg3: memref<640x256xbf16, #tpu.memory_space<vmem>>, %arg4: memref<1x128xf32, #tpu.memory_space<vmem>>, %arg5: memref<640x256xbf16, #tpu.memory_space<vmem>>, %arg6: memref<1x128xf32, #tpu.memory_space<vmem>>, %arg7: memref<640x128xbf16, #tpu.memory_space<vmem>>, %arg8: memref<1x128xf32, #tpu.memory_space<vmem>>, %arg9: memref<128x128xbf16, #tpu.memory_space<vmem>>, %arg10: memref<1x128xf32, #tpu.memory_space<vmem>>, %arg11: memref<128x128xbf16, #tpu.memory_space<vmem>>, %arg12: memref<1x128xf32, #tpu.memory_space<vmem>>, %arg13: memref<1x1x128xf32, #tpu.memory_space<vmem>>) attributes {dimension_semantics = [#tpu.dimension_semantics<parallel>], iteration_bounds = array<i64: 2>, scalar_prefetch = 0 : i64, scratch_operands = 0 : i64, tpu.core_type = #tpu.core_type<tc>, window_params = [{transform_indices = @transform_0, window_bounds = array<i64: 1, 16, 128>}, {transform_indices = @transform_1, window_bounds = array<i64: 1, 16, 128>}, {pipeline_mode = #tpu.pipeline_mode<synchronous>, transform_indices = @transform_2, window_bounds = array<i64: 640, 256>}, {pipeline_mode = #tpu.pipeline_mode<synchronous>, transform_indices = @transform_3, window_bounds = array<i64: 1, 128>}, {pipeline_mode = #tpu.pipeline_mode<synchronous>, transform_indices = @transform_4, window_bounds = array<i64: 640, 256>}, {pipeline_mode = #tpu.pipeline_mode<synchronous>, transform_indices = @transform_5, window_bounds = array<i64: 1, 128>}, {pipeline_mode = #tpu.pipeline_mode<synchronous>, transform_indices = @transform_6, window_bounds = array<i64: 640, 128>}, {pipeline_mode = #tpu.pipeline_mode<synchronous>, transform_indices = @transform_7, window_bounds = array<i64: 1, 128>}, {pipeline_mode = #tpu.pipeline_mode<synchronous>, transform_indices = @transform_8, window_bounds = array<i64: 128, 128>}, {pipeline_mode = #tpu.pipeline_mode<synchronous>, transform_indices = @transform_9, window_bounds = array<i64: 1, 128>}, {pipeline_mode = #tpu.pipeline_mode<synchronous>, transform_indices = @transform_10, window_bounds = array<i64: 128, 128>}, {pipeline_mode = #tpu.pipeline_mode<synchronous>, transform_indices = @transform_11, window_bounds = array<i64: 1, 128>}, {transform_indices = @transform_12, window_bounds = array<i64: 1, 1, 128>}]} {
    %c0 = arith.constant 0 : index
    %c0_0 = arith.constant 0 : index
    %c0_1 = arith.constant 0 : index
    %0 = vector.load %arg1[%c0, %c0_0, %c0_1] : memref<1x16x128xf32, #tpu.memory_space<vmem>>, vector<1x16x128xf32>
    %1 = vector.shape_cast %0 : vector<1x16x128xf32> to vector<16x128xf32>
    %c0_2 = arith.constant 0 : index
    %c0_3 = arith.constant 0 : index
    %c0_4 = arith.constant 0 : index
    %2 = vector.load %arg2[%c0_2, %c0_3, %c0_4] : memref<1x16x128xf32, #tpu.memory_space<vmem>>, vector<1x16x128xf32>
    %3 = vector.shape_cast %2 : vector<1x16x128xf32> to vector<16x128xf32>
    %c0_5 = arith.constant 0 : index
    %c0_6 = arith.constant 0 : index
    %4 = vector.load %arg3[%c0_5, %c0_6] : memref<640x256xbf16, #tpu.memory_space<vmem>>, vector<640x256xbf16>
    %5 = vector.extract_strided_slice %1 {offsets = [0, 0], sizes = [14, 128], strides = [1, 1]} : vector<16x128xf32> to vector<14x128xf32>
    %6 = vector.extract_strided_slice %3 {offsets = [0, 0], sizes = [14, 128], strides = [1, 1]} : vector<16x128xf32> to vector<14x128xf32>
    %7 = vector.extract_strided_slice %1 {offsets = [1, 0], sizes = [14, 128], strides = [1, 1]} : vector<16x128xf32> to vector<14x128xf32>
    %8 = vector.extract_strided_slice %3 {offsets = [1, 0], sizes = [14, 128], strides = [1, 1]} : vector<16x128xf32> to vector<14x128xf32>
    %9 = vector.extract_strided_slice %1 {offsets = [2, 0], sizes = [14, 128], strides = [1, 1]} : vector<16x128xf32> to vector<14x128xf32>
    %10 = tpu.concatenate %5, %6, %7, %8, %9 in 1 : vector<14x128xf32>, vector<14x128xf32>, vector<14x128xf32>, vector<14x128xf32>, vector<14x128xf32> -> vector<14x640xf32>
    %11 = arith.truncf %10 : vector<14x640xf32> to vector<14x640xbf16>
    %cst = arith.constant dense<0.000000e+00> : vector<14x256xf32>
    %12 = tpu.matmul %11, %4, %cst {dimension_numbers = #tpu.dot_dimension_numbers<[1], [0], [0], [1], [0, 0, 1, 1], [], []>} : vector<14x640xbf16>, vector<640x256xbf16>, vector<14x256xf32> -> vector<14x256xf32>
    %13 = vector.extract_strided_slice %12 {offsets = [0, 0], sizes = [14, 128], strides = [1, 1]} : vector<14x256xf32> to vector<14x128xf32>
    %14 = vector.extract_strided_slice %12 {offsets = [0, 128], sizes = [14, 128], strides = [1, 1]} : vector<14x256xf32> to vector<14x128xf32>
    %15 = arith.maximumf %13, %14 : vector<14x128xf32>
    %16 = vector.extract_strided_slice %3 {offsets = [0, 0], sizes = [14, 128], strides = [1, 1]} : vector<16x128xf32> to vector<14x128xf32>
    %17 = vector.extract_strided_slice %1 {offsets = [1, 0], sizes = [14, 128], strides = [1, 1]} : vector<16x128xf32> to vector<14x128xf32>
    %18 = vector.extract_strided_slice %3 {offsets = [1, 0], sizes = [14, 128], strides = [1, 1]} : vector<16x128xf32> to vector<14x128xf32>
    %19 = vector.extract_strided_slice %1 {offsets = [2, 0], sizes = [14, 128], strides = [1, 1]} : vector<16x128xf32> to vector<14x128xf32>
    %20 = vector.extract_strided_slice %3 {offsets = [2, 0], sizes = [14, 128], strides = [1, 1]} : vector<16x128xf32> to vector<14x128xf32>
    %21 = tpu.concatenate %16, %17, %18, %19, %20 in 1 : vector<14x128xf32>, vector<14x128xf32>, vector<14x128xf32>, vector<14x128xf32>, vector<14x128xf32> -> vector<14x640xf32>
    %22 = arith.truncf %21 : vector<14x640xf32> to vector<14x640xbf16>
    %cst_7 = arith.constant dense<0.000000e+00> : vector<14x256xf32>
    %23 = tpu.matmul %22, %4, %cst_7 {dimension_numbers = #tpu.dot_dimension_numbers<[1], [0], [0], [1], [0, 0, 1, 1], [], []>} : vector<14x640xbf16>, vector<640x256xbf16>, vector<14x256xf32> -> vector<14x256xf32>
    %24 = vector.extract_strided_slice %23 {offsets = [0, 0], sizes = [14, 128], strides = [1, 1]} : vector<14x256xf32> to vector<14x128xf32>
    %25 = vector.extract_strided_slice %23 {offsets = [0, 128], sizes = [14, 128], strides = [1, 1]} : vector<14x256xf32> to vector<14x128xf32>
    %26 = arith.maximumf %24, %25 : vector<14x128xf32>
    %27 = arith.maximumf %15, %26 : vector<14x128xf32>
    %c0_8 = arith.constant 0 : index
    %c0_9 = arith.constant 0 : index
    %28 = vector.load %arg4[%c0_8, %c0_9] : memref<1x128xf32, #tpu.memory_space<vmem>>, vector<1x128xf32>
    %29 = vector.broadcast %28 : vector<1x128xf32> to vector<14x128xf32>
    %30 = arith.addf %27, %29 : vector<14x128xf32>
    %cst_10 = arith.constant 0.000000e+00 : f32
    %31 = vector.broadcast %cst_10 : f32 to vector<14x128xf32>
    %32 = arith.maximumf %30, %31 : vector<14x128xf32>
    %c0_11 = arith.constant 0 : index
    %c0_12 = arith.constant 0 : index
    %33 = vector.load %arg5[%c0_11, %c0_12] : memref<640x256xbf16, #tpu.memory_space<vmem>>, vector<640x256xbf16>
    %34 = vector.extract_strided_slice %32 {offsets = [0, 0], sizes = [10, 128], strides = [1, 1]} : vector<14x128xf32> to vector<10x128xf32>
    %35 = vector.extract_strided_slice %32 {offsets = [1, 0], sizes = [10, 128], strides = [1, 1]} : vector<14x128xf32> to vector<10x128xf32>
    %36 = vector.extract_strided_slice %32 {offsets = [2, 0], sizes = [10, 128], strides = [1, 1]} : vector<14x128xf32> to vector<10x128xf32>
    %37 = vector.extract_strided_slice %32 {offsets = [3, 0], sizes = [10, 128], strides = [1, 1]} : vector<14x128xf32> to vector<10x128xf32>
    %38 = vector.extract_strided_slice %32 {offsets = [4, 0], sizes = [10, 128], strides = [1, 1]} : vector<14x128xf32> to vector<10x128xf32>
    %39 = tpu.concatenate %34, %35, %36, %37, %38 in 1 : vector<10x128xf32>, vector<10x128xf32>, vector<10x128xf32>, vector<10x128xf32>, vector<10x128xf32> -> vector<10x640xf32>
    %40 = arith.truncf %39 : vector<10x640xf32> to vector<10x640xbf16>
    %cst_13 = arith.constant dense<0.000000e+00> : vector<10x256xf32>
    %41 = tpu.matmul %40, %33, %cst_13 {dimension_numbers = #tpu.dot_dimension_numbers<[1], [0], [0], [1], [0, 0, 1, 1], [], []>} : vector<10x640xbf16>, vector<640x256xbf16>, vector<10x256xf32> -> vector<10x256xf32>
    %42 = vector.extract_strided_slice %41 {offsets = [0, 0], sizes = [10, 128], strides = [1, 1]} : vector<10x256xf32> to vector<10x128xf32>
    %43 = vector.extract_strided_slice %41 {offsets = [0, 128], sizes = [10, 128], strides = [1, 1]} : vector<10x256xf32> to vector<10x128xf32>
    %44 = arith.maximumf %42, %43 : vector<10x128xf32>
    %45 = vector.extract_strided_slice %44 {offsets = [0, 0], sizes = [1, 128], strides = [1, 1]} : vector<10x128xf32> to vector<1x128xf32>
    %46 = vector.extract_strided_slice %44 {offsets = [2, 0], sizes = [1, 128], strides = [1, 1]} : vector<10x128xf32> to vector<1x128xf32>
    %47 = vector.extract_strided_slice %44 {offsets = [4, 0], sizes = [1, 128], strides = [1, 1]} : vector<10x128xf32> to vector<1x128xf32>
    %48 = vector.extract_strided_slice %44 {offsets = [6, 0], sizes = [1, 128], strides = [1, 1]} : vector<10x128xf32> to vector<1x128xf32>
    %49 = vector.extract_strided_slice %44 {offsets = [8, 0], sizes = [1, 128], strides = [1, 1]} : vector<10x128xf32> to vector<1x128xf32>
    %50 = tpu.concatenate %45, %46, %47, %48, %49 in 0 : vector<1x128xf32>, vector<1x128xf32>, vector<1x128xf32>, vector<1x128xf32>, vector<1x128xf32> -> vector<5x128xf32>
    %51 = vector.extract_strided_slice %44 {offsets = [1, 0], sizes = [1, 128], strides = [1, 1]} : vector<10x128xf32> to vector<1x128xf32>
    %52 = vector.extract_strided_slice %44 {offsets = [3, 0], sizes = [1, 128], strides = [1, 1]} : vector<10x128xf32> to vector<1x128xf32>
    %53 = vector.extract_strided_slice %44 {offsets = [5, 0], sizes = [1, 128], strides = [1, 1]} : vector<10x128xf32> to vector<1x128xf32>
    %54 = vector.extract_strided_slice %44 {offsets = [7, 0], sizes = [1, 128], strides = [1, 1]} : vector<10x128xf32> to vector<1x128xf32>
    %55 = vector.extract_strided_slice %44 {offsets = [9, 0], sizes = [1, 128], strides = [1, 1]} : vector<10x128xf32> to vector<1x128xf32>
    %56 = tpu.concatenate %51, %52, %53, %54, %55 in 0 : vector<1x128xf32>, vector<1x128xf32>, vector<1x128xf32>, vector<1x128xf32>, vector<1x128xf32> -> vector<5x128xf32>
    %57 = arith.maximumf %50, %56 : vector<5x128xf32>
    %c0_14 = arith.constant 0 : index
    %c0_15 = arith.constant 0 : index
    %58 = vector.load %arg6[%c0_14, %c0_15] : memref<1x128xf32, #tpu.memory_space<vmem>>, vector<1x128xf32>
    %59 = vector.broadcast %58 : vector<1x128xf32> to vector<5x128xf32>
    %60 = arith.addf %57, %59 : vector<5x128xf32>
    %cst_16 = arith.constant 0.000000e+00 : f32
    %61 = vector.broadcast %cst_16 : f32 to vector<5x128xf32>
    %62 = arith.maximumf %60, %61 : vector<5x128xf32>
    %63 = vector.extract_strided_slice %62 {offsets = [0, 0], sizes = [1, 128], strides = [1, 1]} : vector<5x128xf32> to vector<1x128xf32>
    %64 = vector.extract_strided_slice %62 {offsets = [1, 0], sizes = [1, 128], strides = [1, 1]} : vector<5x128xf32> to vector<1x128xf32>
    %65 = vector.extract_strided_slice %62 {offsets = [2, 0], sizes = [1, 128], strides = [1, 1]} : vector<5x128xf32> to vector<1x128xf32>
    %66 = vector.extract_strided_slice %62 {offsets = [3, 0], sizes = [1, 128], strides = [1, 1]} : vector<5x128xf32> to vector<1x128xf32>
    %67 = vector.extract_strided_slice %62 {offsets = [4, 0], sizes = [1, 128], strides = [1, 1]} : vector<5x128xf32> to vector<1x128xf32>
    %68 = tpu.concatenate %63, %64, %65, %66, %67 in 1 : vector<1x128xf32>, vector<1x128xf32>, vector<1x128xf32>, vector<1x128xf32>, vector<1x128xf32> -> vector<1x640xf32>
    %69 = arith.truncf %68 : vector<1x640xf32> to vector<1x640xbf16>
    %c0_17 = arith.constant 0 : index
    %c0_18 = arith.constant 0 : index
    %70 = vector.load %arg7[%c0_17, %c0_18] : memref<640x128xbf16, #tpu.memory_space<vmem>>, vector<640x128xbf16>
    %cst_19 = arith.constant dense<0.000000e+00> : vector<1x128xf32>
    %71 = tpu.matmul %69, %70, %cst_19 {dimension_numbers = #tpu.dot_dimension_numbers<[1], [0], [0], [1], [0, 0, 1, 1], [], []>} : vector<1x640xbf16>, vector<640x128xbf16>, vector<1x128xf32> -> vector<1x128xf32>
    %c0_20 = arith.constant 0 : index
    %c0_21 = arith.constant 0 : index
    %72 = vector.load %arg8[%c0_20, %c0_21] : memref<1x128xf32, #tpu.memory_space<vmem>>, vector<1x128xf32>
    %73 = arith.addf %71, %72 : vector<1x128xf32>
    %cst_22 = arith.constant 0.000000e+00 : f32
    %74 = vector.broadcast %cst_22 : f32 to vector<1x128xf32>
    %75 = arith.maximumf %73, %74 : vector<1x128xf32>
    %76 = arith.truncf %75 : vector<1x128xf32> to vector<1x128xbf16>
    %c0_23 = arith.constant 0 : index
    %c0_24 = arith.constant 0 : index
    %77 = vector.load %arg9[%c0_23, %c0_24] : memref<128x128xbf16, #tpu.memory_space<vmem>>, vector<128x128xbf16>
    %cst_25 = arith.constant dense<0.000000e+00> : vector<1x128xf32>
    %78 = tpu.matmul %76, %77, %cst_25 {dimension_numbers = #tpu.dot_dimension_numbers<[1], [0], [0], [1], [0, 0, 1, 1], [], []>} : vector<1x128xbf16>, vector<128x128xbf16>, vector<1x128xf32> -> vector<1x128xf32>
    %c0_26 = arith.constant 0 : index
    %c0_27 = arith.constant 0 : index
    %79 = vector.load %arg10[%c0_26, %c0_27] : memref<1x128xf32, #tpu.memory_space<vmem>>, vector<1x128xf32>
    %80 = arith.addf %78, %79 : vector<1x128xf32>
    %cst_28 = arith.constant 0.000000e+00 : f32
    %81 = vector.broadcast %cst_28 : f32 to vector<1x128xf32>
    %82 = arith.maximumf %80, %81 : vector<1x128xf32>
    %83 = arith.truncf %82 : vector<1x128xf32> to vector<1x128xbf16>
    %c0_29 = arith.constant 0 : index
    %c0_30 = arith.constant 0 : index
    %84 = vector.load %arg11[%c0_29, %c0_30] : memref<128x128xbf16, #tpu.memory_space<vmem>>, vector<128x128xbf16>
    %cst_31 = arith.constant dense<0.000000e+00> : vector<1x128xf32>
    %85 = tpu.matmul %83, %84, %cst_31 {dimension_numbers = #tpu.dot_dimension_numbers<[1], [0], [0], [1], [0, 0, 1, 1], [], []>} : vector<1x128xbf16>, vector<128x128xbf16>, vector<1x128xf32> -> vector<1x128xf32>
    %c0_32 = arith.constant 0 : index
    %c0_33 = arith.constant 0 : index
    %86 = vector.load %arg12[%c0_32, %c0_33] : memref<1x128xf32, #tpu.memory_space<vmem>>, vector<1x128xf32>
    %87 = arith.addf %85, %86 : vector<1x128xf32>
    %c0_34 = arith.constant 0 : index
    %c0_35 = arith.constant 0 : index
    %c0_36 = arith.constant 0 : index
    %88 = vector.load %arg13[%c0_34, %c0_35, %c0_36] : memref<1x1x128xf32, #tpu.memory_space<vmem>>, vector<1x1x128xf32>
    %89 = vector.shape_cast %88 : vector<1x1x128xf32> to vector<1x128xf32>
    %90 = vector.shape_cast %87 : vector<1x128xf32> to vector<1x1x128xf32>
    tpu.vector_store %arg13[%c0_34, %c0_35, %c0_36], %90 {strides = array<i32>} : memref<1x1x128xf32, #tpu.memory_space<vmem>>, vector<1x1x128xf32>,
    return
  }
  func.func @transform_0(%arg0: i32) -> (i32, i32, i32) {
    %c0_i32 = arith.constant 0 : i32
    %c0_i32_0 = arith.constant 0 : i32
    %c0_i32_1 = arith.constant 0 : i32
    return %arg0, %c0_i32, %c0_i32_0 : i32, i32, i32
  }
  func.func @transform_1(%arg0: i32) -> (i32, i32, i32) {
    %c0_i32 = arith.constant 0 : i32
    %c0_i32_0 = arith.constant 0 : i32
    %c0_i32_1 = arith.constant 0 : i32
    return %arg0, %c0_i32, %c0_i32_0 : i32, i32, i32
  }
  func.func @transform_2(%arg0: i32) -> (i32, i32) {
    %c0_i32 = arith.constant 0 : i32
    %c0_i32_0 = arith.constant 0 : i32
    %c0_i32_1 = arith.constant 0 : i32
    return %c0_i32, %c0_i32_0 : i32, i32
  }
  func.func @transform_3(%arg0: i32) -> (i32, i32) {
    %c0_i32 = arith.constant 0 : i32
    %c0_i32_0 = arith.constant 0 : i32
    %c0_i32_1 = arith.constant 0 : i32
    return %c0_i32, %c0_i32_0 : i32, i32
  }
  func.func @transform_4(%arg0: i32) -> (i32, i32) {
    %c0_i32 = arith.constant 0 : i32
    %c0_i32_0 = arith.constant 0 : i32
    %c0_i32_1 = arith.constant 0 : i32
    return %c0_i32, %c0_i32_0 : i32, i32
  }
  func.func @transform_5(%arg0: i32) -> (i32, i32) {
    %c0_i32 = arith.constant 0 : i32
    %c0_i32_0 = arith.constant 0 : i32
    %c0_i32_1 = arith.constant 0 : i32
    return %c0_i32, %c0_i32_0 : i32, i32
  }
  func.func @transform_6(%arg0: i32) -> (i32, i32) {
    %c0_i32 = arith.constant 0 : i32
    %c0_i32_0 = arith.constant 0 : i32
    %c0_i32_1 = arith.constant 0 : i32
    return %c0_i32, %c0_i32_0 : i32, i32
  }
  func.func @transform_7(%arg0: i32) -> (i32, i32) {
    %c0_i32 = arith.constant 0 : i32
    %c0_i32_0 = arith.constant 0 : i32
    %c0_i32_1 = arith.constant 0 : i32
    return %c0_i32, %c0_i32_0 : i32, i32
  }
  func.func @transform_8(%arg0: i32) -> (i32, i32) {
    %c0_i32 = arith.constant 0 : i32
    %c0_i32_0 = arith.constant 0 : i32
    %c0_i32_1 = arith.constant 0 : i32
    return %c0_i32, %c0_i32_0 : i32, i32
  }
  func.func @transform_9(%arg0: i32) -> (i32, i32) {
    %c0_i32 = arith.constant 0 : i32
    %c0_i32_0 = arith.constant 0 : i32
    %c0_i32_1 = arith.constant 0 : i32
    return %c0_i32, %c0_i32_0 : i32, i32
  }
  func.func @transform_10(%arg0: i32) -> (i32, i32) {
    %c0_i32 = arith.constant 0 : i32
    %c0_i32_0 = arith.constant 0 : i32
    %c0_i32_1 = arith.constant 0 : i32
    return %c0_i32, %c0_i32_0 : i32, i32
  }
  func.func @transform_11(%arg0: i32) -> (i32, i32) {
    %c0_i32 = arith.constant 0 : i32
    %c0_i32_0 = arith.constant 0 : i32
    %c0_i32_1 = arith.constant 0 : i32
    return %c0_i32, %c0_i32_0 : i32, i32
  }
  func.func @transform_12(%arg0: i32) -> (i32, i32, i32) {
    %c0_i32 = arith.constant 0 : i32
    %c0_i32_0 = arith.constant 0 : i32
    %c0_i32_1 = arith.constant 0 : i32
    return %arg0, %c0_i32, %c0_i32_0 : i32, i32, i32
  }
}

</mosaic_0001>

<llo_original>
// kernel: net_forward.1
$region0: #{net_forward.1}
  #allocation0 [shape = 'u32[]', space=smem, size = 0x4, offset = 0x4, fixed_abs, tag = 'smem constant byte address 0x4 - core index']
  #allocation1 [shape = 'u32[72,128]{1,0:T(1,128)}', space=vmem, size = 0x9000, scoped, tag = 'internal scratch']
  %s0 = inlined_call_operand.vmem [shape: f32[2,16,128], index: 0, kind: input, shape index: {}]
  %s1 = inlined_call_operand.vmem [shape: f32[2,16,128], index: 1, kind: input, shape index: {}]
  %s2 = inlined_call_operand.vmem [shape: bf16[640,256], index: 2, kind: input, shape index: {}]
  %s3 = inlined_call_operand.vmem [shape: f32[1,128], index: 3, kind: input, shape index: {}]
  %s4 = inlined_call_operand.hbm [shape: bf16[640,256], index: 4, kind: input, shape index: {}]
  %s5 = inlined_call_operand.vmem [shape: f32[1,128], index: 5, kind: input, shape index: {}]
  %s6 = inlined_call_operand.vmem [shape: bf16[640,128], index: 6, kind: input, shape index: {}]
  %s7 = inlined_call_operand.vmem [shape: f32[1,128], index: 7, kind: input, shape index: {}]
  %s8 = inlined_call_operand.vmem [shape: bf16[128,128], index: 8, kind: input, shape index: {}]
  %s9 = inlined_call_operand.vmem [shape: f32[1,128], index: 9, kind: input, shape index: {}]
  %s10 = inlined_call_operand.hbm [shape: bf16[128,128], index: 10, kind: input, shape index: {}]
  %s11 = inlined_call_operand.vmem [shape: f32[1,128], index: 11, kind: input, shape index: {}]
  %s12 = inlined_call_operand.hbm [shape: f32[2,1,128], index: 12, kind: output, shape index: {}]
  %s13 = sld [smem:[#allocation0]]
  $region89: #{net_forward.1} parent=0
    _
  %s15 = ssub.s32 1, %s13
  %s16 = scalar_select 0, %s15, %s13
  $region1: #{net_forward.1} parent=0
    #allocation2 [shape = 'u8[327680]{0}', space=vmem, size = 0x50000, scoped, tag = 'input window, operand 4, single buffered']
    #allocation3 [shape = 's32[2]{0}', space=sflag, size = 0x8, scoped, tag = 'scoped memory for net_forward.1']
    #allocation4 [shape = 's32[2]{0}', space=sflag, size = 0x8, scoped, tag = 'scoped memory for net_forward.1']
    #allocation5 [shape = 'u8[32768]{0}', space=vmem, size = 0x8000, scoped, tag = 'input window, operand 10, single buffered']
    #allocation6 [shape = 's32[1]{0}', space=sflag, size = 0x4, scoped, tag = 'scoped memory for net_forward.1']
    #allocation7 [shape = 'u8[1024]{0}', space=vmem, size = 0x400, scoped, tag = 'output window, operand 0']
    %17 = vsyncpa [#allocation3], 0
    %18 = vsyncpa [#allocation6], 0
    %19 = vsyncpa [#allocation4], 0
    %s20 = scalar_lea.sflag [#allocation4], 1
    %21 = vsyncpa %s20, 0
    loop: start=0, step=1, limit=4
    $region2: #{net_forward.1} parent=1 // loop_pre_header
      _
    $region3: #{net_forward.1} parent=1 // loop_header
      %s23 = sphi 0, %s27
      %p24 = scmp.ge.s32.totalorder %s23, 4
      %s33 = sphi 0, %s35
      %s36 = sphi 0, %s33
      %s37 = sphi 0, %s36
      %s53 = sphi 0, %s37
      %s59 = sphi 0, %s61
      %s62 = sphi 0, %s59
      %s63 = sphi 0, %s62
      %s79 = sphi 0, %s63
      %s83 = sphi 0, %s83
      %s85 = sphi 0, %s83
      %s86 = sphi 0, %s85
      %s100 = sphi 0, %s86
      %s104 = sphi 0, %s104
      %s106 = sphi 0, %s104
      %s107 = sphi 0, %s106
      %s121 = sphi 0, %s107
      %s125 = sphi 0, %s125
      %s127 = sphi 0, %s125
      %s128 = sphi 0, %s127
      %s142 = sphi 0, %s128
      %s146 = sphi 0, %s146
      %s148 = sphi 0, %s146
      %s149 = sphi 0, %s148
      %s163 = sphi 0, %s149
      %s167 = sphi 0, %s167
      %s169 = sphi 0, %s167
      %s170 = sphi 0, %s169
      %s184 = sphi 0, %s170
      %s188 = sphi 0, %s188
      %s190 = sphi 0, %s188
      %s191 = sphi 0, %s190
      %s205 = sphi 0, %s191
      %s209 = sphi 0, %s209
      %s211 = sphi 0, %s209
      %s212 = sphi 0, %s211
      %s226 = sphi 0, %s212
      %s230 = sphi 0, %s230
      %s232 = sphi 0, %s230
      %s233 = sphi 0, %s232
      %s247 = sphi 0, %s233
      %s251 = sphi 0, %s251
      %s253 = sphi 0, %s251
      %s254 = sphi 0, %s253
      %s268 = sphi 0, %s254
      %s272 = sphi 0, %s272
      %s274 = sphi 0, %s272
      %s275 = sphi 0, %s274
      %s289 = sphi 0, %s275
      %s295 = sphi 0, %s297
      %s298 = sphi 0, %s295
      %s299 = sphi 0, %s298
      %s315 = sphi 0, %s299
    $region4: #{net_forward.1} parent=1 // loop_header_branch
      %26 = sbr.rel (%p24) target = $region8
    $region5: #{net_forward.1} parent=1 // loop_body
      %s28 = ssub.s32 %s23, 1
      %s29 = ssub.s32 %s23, 2
      %s30 = sadd.s32 %s23, 1
      %s31 = ssub.s32 %s23, %s30
      %p32 = scmp.eq.s32.totalorder %s31, 0
      %s34 = sadd.s32 %s33, 1
      %s35 = scalar_select %p32, %s33, %s34
      %p38 = pneg %p32
      %p39 = scmp.eq.s32.totalorder %s23, 1
      %p40 = por %p38, %p39
      %p41 = scmp.ne.s32.totalorder %s33, %s36
      %p42 = scmp.eq.s32.totalorder %s23, 0
      %p43 = por %p41, %p42
      %p44 = scmp.ne.s32.totalorder %s33, %s36
      %p45 = scmp.eq.s32.totalorder %s28, 1
      %p46 = por %p44, %p45
      %p47 = scmp.ne.s32.totalorder %s36, %s37
      %p48 = scmp.eq.s32.totalorder %s28, 0
      %p49 = por %p47, %p48
      %p50 = scmp.ne.s32.totalorder %s36, %s37
      %p51 = scmp.eq.s32.totalorder %s29, 1
      %p52 = por %p50, %p51
      %p54 = scmp.ne.s32.totalorder %s37, %s53
      %p55 = scmp.eq.s32.totalorder %s29, 0
      %p56 = por %p54, %p55
      %s57 = ssub.s32 %s23, %s30
      %p58 = scmp.eq.s32.totalorder %s57, 0
      %s60 = sadd.s32 %s59, 1
      %s61 = scalar_select %p58, %s59, %s60
      %p64 = pneg %p58
      %p65 = scmp.eq.s32.totalorder %s23, 1
      %p66 = por %p64, %p65
      %p67 = scmp.ne.s32.totalorder %s59, %s62
      %p68 = scmp.eq.s32.totalorder %s23, 0
      %p69 = por %p67, %p68
      %p70 = scmp.ne.s32.totalorder %s59, %s62
      %p71 = scmp.eq.s32.totalorder %s28, 1
      %p72 = por %p70, %p71
      %p73 = scmp.ne.s32.totalorder %s62, %s63
      %p74 = scmp.eq.s32.totalorder %s28, 0
      %p75 = por %p73, %p74
      %p76 = scmp.ne.s32.totalorder %s62, %s63
      %p77 = scmp.eq.s32.totalorder %s29, 1
      %p78 = por %p76, %p77
      %p80 = scmp.ne.s32.totalorder %s63, %s79
      %p81 = scmp.eq.s32.totalorder %s29, 0
      %p82 = por %p80, %p81
      %s84 = sadd.s32 %s83, 1
      %p87 = scmp.eq.s32.totalorder %s23, 1
      %p88 = scmp.ne.s32.totalorder %s83, %s85
      %p89 = scmp.eq.s32.totalorder %s23, 0
      %p90 = por %p88, %p89
      %p91 = scmp.ne.s32.totalorder %s83, %s85
      %p92 = scmp.eq.s32.totalorder %s28, 1
      %p93 = por %p91, %p92
      %p94 = scmp.ne.s32.totalorder %s85, %s86
      %p95 = scmp.eq.s32.totalorder %s28, 0
      %p96 = por %p94, %p95
      %p97 = scmp.ne.s32.totalorder %s85, %s86
      %p98 = scmp.eq.s32.totalorder %s29, 1
      %p99 = por %p97, %p98
      %p101 = scmp.ne.s32.totalorder %s86, %s100
      %p102 = scmp.eq.s32.totalorder %s29, 0
      %p103 = por %p101, %p102
      %s105 = sadd.s32 %s104, 1
      %p108 = scmp.eq.s32.totalorder %s23, 1
      %p109 = scmp.ne.s32.totalorder %s104, %s106
      %p110 = scmp.eq.s32.totalorder %s23, 0
      %p111 = por %p109, %p110
      %p112 = scmp.ne.s32.totalorder %s104, %s106
      %p113 = scmp.eq.s32.totalorder %s28, 1
      %p114 = por %p112, %p113
      %p115 = scmp.ne.s32.totalorder %s106, %s107
      %p116 = scmp.eq.s32.totalorder %s28, 0
      %p117 = por %p115, %p116
      %p118 = scmp.ne.s32.totalorder %s106, %s107
      %p119 = scmp.eq.s32.totalorder %s29, 1
      %p120 = por %p118, %p119
      %p122 = scmp.ne.s32.totalorder %s107, %s121
      %p123 = scmp.eq.s32.totalorder %s29, 0
      %p124 = por %p122, %p123
      %s126 = sadd.s32 %s125, 1
      %p129 = scmp.eq.s32.totalorder %s23, 1
      %p130 = scmp.ne.s32.totalorder %s125, %s127
      %p131 = scmp.eq.s32.totalorder %s23, 0
      %p132 = por %p130, %p131
      %p133 = scmp.ne.s32.totalorder %s125, %s127
      %p134 = scmp.eq.s32.totalorder %s28, 1
      %p135 = por %p133, %p134
      %p136 = scmp.ne.s32.totalorder %s127, %s128
      %p137 = scmp.eq.s32.totalorder %s28, 0
      %p138 = por %p136, %p137
      %p139 = scmp.ne.s32.totalorder %s127, %s128
      %p140 = scmp.eq.s32.totalorder %s29, 1
      %p141 = por %p139, %p140
      %p143 = scmp.ne.s32.totalorder %s128, %s142
      %p144 = scmp.eq.s32.totalorder %s29, 0
      %p145 = por %p143, %p144
      %s147 = sadd.s32 %s146, 1
      %p150 = scmp.eq.s32.totalorder %s23, 1
      %p151 = scmp.ne.s32.totalorder %s146, %s148
      %p152 = scmp.eq.s32.totalorder %s23, 0
      %p153 = por %p151, %p152
      %p154 = scmp.ne.s32.totalorder %s146, %s148
      %p155 = scmp.eq.s32.totalorder %s28, 1
      %p156 = por %p154, %p155
      %p157 = scmp.ne.s32.totalorder %s148, %s149
      %p158 = scmp.eq.s32.totalorder %s28, 0
      %p159 = por %p157, %p158
      %p160 = scmp.ne.s32.totalorder %s148, %s149
      %p161 = scmp.eq.s32.totalorder %s29, 1
      %p162 = por %p160, %p161
      %p164 = scmp.ne.s32.totalorder %s149, %s163
      %p165 = scmp.eq.s32.totalorder %s29, 0
      %p166 = por %p164, %p165
      %s168 = sadd.s32 %s167, 1
      %p171 = scmp.eq.s32.totalorder %s23, 1
      %p172 = scmp.ne.s32.totalorder %s167, %s169
      %p173 = scmp.eq.s32.totalorder %s23, 0
      %p174 = por %p172, %p173
      %p175 = scmp.ne.s32.totalorder %s167, %s169
      %p176 = scmp.eq.s32.totalorder %s28, 1
      %p177 = por %p175, %p176
      %p178 = scmp.ne.s32.totalorder %s169, %s170
      %p179 = scmp.eq.s32.totalorder %s28, 0
      %p180 = por %p178, %p179
      %p181 = scmp.ne.s32.totalorder %s169, %s170
      %p182 = scmp.eq.s32.totalorder %s29, 1
      %p183 = por %p181, %p182
      %p185 = scmp.ne.s32.totalorder %s170, %s184
      %p186 = scmp.eq.s32.totalorder %s29, 0
      %p187 = por %p185, %p186
      %s189 = sadd.s32 %s188, 1
      %p192 = scmp.eq.s32.totalorder %s23, 1
      %p193 = scmp.ne.s32.totalorder %s188, %s190
      %p194 = scmp.eq.s32.totalorder %s23, 0
      %p195 = por %p193, %p194
      %p196 = scmp.ne.s32.totalorder %s188, %s190
      %p197 = scmp.eq.s32.totalorder %s28, 1
      %p198 = por %p196, %p197
      %p199 = scmp.ne.s32.totalorder %s190, %s191
      %p200 = scmp.eq.s32.totalorder %s28, 0
      %p201 = por %p199, %p200
      %p202 = scmp.ne.s32.totalorder %s190, %s191
      %p203 = scmp.eq.s32.totalorder %s29, 1
      %p204 = por %p202, %p203
      %p206 = scmp.ne.s32.totalorder %s191, %s205
      %p207 = scmp.eq.s32.totalorder %s29, 0
      %p208 = por %p206, %p207
      %s210 = sadd.s32 %s209, 1
      %p213 = scmp.eq.s32.totalorder %s23, 1
      %p214 = scmp.ne.s32.totalorder %s209, %s211
      %p215 = scmp.eq.s32.totalorder %s23, 0
      %p216 = por %p214, %p215
      %p217 = scmp.ne.s32.totalorder %s209, %s211
      %p218 = scmp.eq.s32.totalorder %s28, 1
      %p219 = por %p217, %p218
      %p220 = scmp.ne.s32.totalorder %s211, %s212
      %p221 = scmp.eq.s32.totalorder %s28, 0
      %p222 = por %p220, %p221
      %p223 = scmp.ne.s32.totalorder %s211, %s212
      %p224 = scmp.eq.s32.totalorder %s29, 1
      %p225 = por %p223, %p224
      %p227 = scmp.ne.s32.totalorder %s212, %s226
      %p228 = scmp.eq.s32.totalorder %s29, 0
      %p229 = por %p227, %p228
      %s231 = sadd.s32 %s230, 1
      %p234 = scmp.eq.s32.totalorder %s23, 1
      %p235 = scmp.ne.s32.totalorder %s230, %s232
      %p236 = scmp.eq.s32.totalorder %s23, 0
      %p237 = por %p235, %p236
      %p238 = scmp.ne.s32.totalorder %s230, %s232
      %p239 = scmp.eq.s32.totalorder %s28, 1
      %p240 = por %p238, %p239
      %p241 = scmp.ne.s32.totalorder %s232, %s233
      %p242 = scmp.eq.s32.totalorder %s28, 0
      %p243 = por %p241, %p242
      %p244 = scmp.ne.s32.totalorder %s232, %s233
      %p245 = scmp.eq.s32.totalorder %s29, 1
      %p246 = por %p244, %p245
      %p248 = scmp.ne.s32.totalorder %s233, %s247
      %p249 = scmp.eq.s32.totalorder %s29, 0
      %p250 = por %p248, %p249
      %s252 = sadd.s32 %s251, 1
      %p255 = scmp.eq.s32.totalorder %s23, 1
      %p256 = scmp.ne.s32.totalorder %s251, %s253
      %p257 = scmp.eq.s32.totalorder %s23, 0
      %p258 = por %p256, %p257
      %p259 = scmp.ne.s32.totalorder %s251, %s253
      %p260 = scmp.eq.s32.totalorder %s28, 1
      %p261 = por %p259, %p260
      %p262 = scmp.ne.s32.totalorder %s253, %s254
      %p263 = scmp.eq.s32.totalorder %s28, 0
      %p264 = por %p262, %p263
      %p265 = scmp.ne.s32.totalorder %s253, %s254
      %p266 = scmp.eq.s32.totalorder %s29, 1
      %p267 = por %p265, %p266
      %p269 = scmp.ne.s32.totalorder %s254, %s268
      %p270 = scmp.eq.s32.totalorder %s29, 0
      %p271 = por %p269, %p270
      %s273 = sadd.s32 %s272, 1
      %p276 = scmp.eq.s32.totalorder %s23, 1
      %p277 = scmp.ne.s32.totalorder %s272, %s274
      %p278 = scmp.eq.s32.totalorder %s23, 0
      %p279 = por %p277, %p278
      %p280 = scmp.ne.s32.totalorder %s272, %s274
      %p281 = scmp.eq.s32.totalorder %s28, 1
      %p282 = por %p280, %p281
      %p283 = scmp.ne.s32.totalorder %s274, %s275
      %p284 = scmp.eq.s32.totalorder %s28, 0
      %p285 = por %p283, %p284
      %p286 = scmp.ne.s32.totalorder %s274, %s275
      %p287 = scmp.eq.s32.totalorder %s29, 1
      %p288 = por %p286, %p287
      %p290 = scmp.ne.s32.totalorder %s275, %s289
      %p291 = scmp.eq.s32.totalorder %s29, 0
      %p292 = por %p290, %p291
      %s293 = ssub.s32 %s23, %s30
      %p294 = scmp.eq.s32.totalorder %s293, 0
      %s296 = sadd.s32 %s295, 1
      %s297 = scalar_select %p294, %s295, %s296
      %p300 = pneg %p294
      %p301 = scmp.eq.s32.totalorder %s23, 1
      %p302 = por %p300, %p301
      %p303 = scmp.ne.s32.totalorder %s295, %s298
      %p304 = scmp.eq.s32.totalorder %s23, 0
      %p305 = por %p303, %p304
      %p306 = scmp.ne.s32.totalorder %s295, %s298
      %p307 = scmp.eq.s32.totalorder %s28, 1
      %p308 = por %p306, %p307
      %p309 = scmp.ne.s32.totalorder %s298, %s299
      %p310 = scmp.eq.s32.totalorder %s28, 0
      %p311 = por %p309, %p310
      %p312 = scmp.ne.s32.totalorder %s298, %s299
      %p313 = scmp.eq.s32.totalorder %s29, 1
      %p314 = por %p312, %p313
      %p316 = scmp.ne.s32.totalorder %s299, %s315
      %p317 = scmp.eq.s32.totalorder %s29, 0
      %p318 = por %p316, %p317
      %p319 = scmp.le.s32.totalorder 1, %s23
      %p320 = scmp.lt.s32.totalorder %s23, 3
      %p321 = pnand %p319, %p320
      %p322 = pneg %p321
      // Predicated region
      $region9: #{net_forward.1} parent=5 // pred_check
        _
      $region10: #{net_forward.1} parent=5 // pred_check_branch
        %324 = sbr.rel (%p321) target = $region12
      $region11: #{net_forward.1} parent=5 // pred_region
        %s325 = ssub.s32 %s23, 1
        // Predicated region
        $region13: #{net_forward.1} parent=11 // pred_check
          %p326 = pneg %p96
        $region14: #{net_forward.1} parent=11 // pred_check_branch
          %328 = sbr.rel (%p326) target = $region16
        $region15: #{net_forward.1} parent=11 // pred_region
          _
        $region16: #{net_forward.1} parent=11 // pred_fallthru
          _
        // Predicated region
        $region17: #{net_forward.1} parent=11 // pred_check
          %p329 = pneg %p117
        $region18: #{net_forward.1} parent=11 // pred_check_branch
          %331 = sbr.rel (%p329) target = $region20
        $region19: #{net_forward.1} parent=11 // pred_region
          _
        $region20: #{net_forward.1} parent=11 // pred_fallthru
          _
        // Predicated region
        $region21: #{net_forward.1} parent=11 // pred_check
          %p332 = pneg %p138
        $region22: #{net_forward.1} parent=11 // pred_check_branch
          %334 = sbr.rel (%p332) target = $region24
        $region23: #{net_forward.1} parent=11 // pred_region
          %336 = vsyncadd [#allocation3], 0
          %s337 = sshll.u32 %s4, 4
          %s338 = int_to_ptr.hbm [resolvable:$true] %s337
          %s339 = sshll.u32 [#allocation2], 4
          %s340 = int_to_ptr.vmem [resolvable:$true] %s339
          %345 = dma.hbm_to_vmem [thread:$0]  %s338, 10240, %s340, [#allocation3], 128, 128, 8
        $region24: #{net_forward.1} parent=11 // pred_fallthru
          _
        // Predicated region
        $region25: #{net_forward.1} parent=11 // pred_check
          %p346 = pneg %p159
        $region26: #{net_forward.1} parent=11 // pred_check_branch
          %348 = sbr.rel (%p346) target = $region28
        $region27: #{net_forward.1} parent=11 // pred_region
          _
        $region28: #{net_forward.1} parent=11 // pred_fallthru
          _
        // Predicated region
        $region29: #{net_forward.1} parent=11 // pred_check
          %p349 = pneg %p180
        $region30: #{net_forward.1} parent=11 // pred_check_branch
          %351 = sbr.rel (%p349) target = $region32
        $region31: #{net_forward.1} parent=11 // pred_region
          _
        $region32: #{net_forward.1} parent=11 // pred_fallthru
          _
        // Predicated region
        $region33: #{net_forward.1} parent=11 // pred_check
          %p352 = pneg %p201
        $region34: #{net_forward.1} parent=11 // pred_check_branch
          %354 = sbr.rel (%p352) target = $region36
        $region35: #{net_forward.1} parent=11 // pred_region
          _
        $region36: #{net_forward.1} parent=11 // pred_fallthru
          _
        // Predicated region
        $region37: #{net_forward.1} parent=11 // pred_check
          %p355 = pneg %p222
        $region38: #{net_forward.1} parent=11 // pred_check_branch
          %357 = sbr.rel (%p355) target = $region40
        $region39: #{net_forward.1} parent=11 // pred_region
          _
        $region40: #{net_forward.1} parent=11 // pred_fallthru
          _
        // Predicated region
        $region41: #{net_forward.1} parent=11 // pred_check
          %p358 = pneg %p243
        $region42: #{net_forward.1} parent=11 // pred_check_branch
          %360 = sbr.rel (%p358) target = $region44
        $region43: #{net_forward.1} parent=11 // pred_region
          _
        $region44: #{net_forward.1} parent=11 // pred_fallthru
          _
        // Predicated region
        $region45: #{net_forward.1} parent=11 // pred_check
          %p361 = pneg %p264
        $region46: #{net_forward.1} parent=11 // pred_check_branch
          %363 = sbr.rel (%p361) target = $region48
        $region47: #{net_forward.1} parent=11 // pred_region
          %365 = vsyncadd [#allocation6], 0
          %s366 = sshll.u32 %s10, 4
          %s367 = int_to_ptr.hbm [resolvable:$true] %s366
          %s368 = sshll.u32 [#allocation5], 4
          %s369 = int_to_ptr.vmem [resolvable:$true] %s368
          %374 = dma.hbm_to_vmem [thread:$0]  %s367, 1024, %s369, [#allocation6], 64, 64, 4
        $region48: #{net_forward.1} parent=11 // pred_fallthru
          _
        // Predicated region
        $region49: #{net_forward.1} parent=11 // pred_check
          %p375 = pneg %p285
        $region50: #{net_forward.1} parent=11 // pred_check_branch
          %377 = sbr.rel (%p375) target = $region52
        $region51: #{net_forward.1} parent=11 // pred_region
          _
        $region52: #{net_forward.1} parent=11 // pred_fallthru
          _
      $region12: #{net_forward.1} parent=5 // pred_fallthru
        _
      %p378 = scmp.lt.s32.totalorder %s23, 2
      // Predicated region
      $region53: #{net_forward.1} parent=5 // pred_check
        %p379 = pneg %p378
      $region54: #{net_forward.1} parent=5 // pred_check_branch
        %381 = sbr.rel (%p379) target = $region56
      $region55: #{net_forward.1} parent=5 // pred_region
        // Predicated region
        $region57: #{net_forward.1} parent=55 // pred_check
          %p382 = pneg %p43
        $region58: #{net_forward.1} parent=55 // pred_check_branch
          %384 = sbr.rel (%p382) target = $region60
        $region59: #{net_forward.1} parent=55 // pred_region
          %p385 = scmp.lt.s32.totalorder %s23, 1
          %s386 = scalar_select %p385, %s23, 1
          %s387 = smul.addr %s386, 2
          %s388 = smul.addr %s387, 8
          %s389 = scalar_lea.vmem %s0, %s388
        $region60: #{net_forward.1} parent=55 // pred_fallthru
          _
        // Predicated region
        $region61: #{net_forward.1} parent=55 // pred_check
          %p390 = pneg %p69
        $region62: #{net_forward.1} parent=55 // pred_check_branch
          %392 = sbr.rel (%p390) target = $region64
        $region63: #{net_forward.1} parent=55 // pred_region
          %p393 = scmp.lt.s32.totalorder %s23, 1
          %s394 = scalar_select %p393, %s23, 1
          %s395 = smul.addr %s394, 2
          %s396 = smul.addr %s395, 8
          %s397 = scalar_lea.vmem %s1, %s396
        $region64: #{net_forward.1} parent=55 // pred_fallthru
          _
      $region56: #{net_forward.1} parent=5 // pred_fallthru
        _
      %p398 = scmp.le.s32.totalorder 1, %s23
      %p399 = scmp.lt.s32.totalorder %s23, 3
      %p400 = pnand %p398, %p399
      %p401 = pneg %p400
      // Predicated region
      $region65: #{net_forward.1} parent=5 // pred_check
        _
      $region66: #{net_forward.1} parent=5 // pred_check_branch
        %403 = sbr.rel (%p400) target = $region68
      $region67: #{net_forward.1} parent=5 // pred_region
        %s404 = ssub.s32 %s23, 1
        // Predicated region
        $region69: #{net_forward.1} parent=67 // pred_check
          %p405 = pneg %p138
        $region70: #{net_forward.1} parent=67 // pred_check_branch
          %407 = sbr.rel (%p405) target = $region72
        $region71: #{net_forward.1} parent=67 // pred_region
          %409 = dma.done [#allocation3], 10240
        $region72: #{net_forward.1} parent=67 // pred_fallthru
          _
        // Predicated region
        $region73: #{net_forward.1} parent=67 // pred_check
          %p410 = pneg %p264
        $region74: #{net_forward.1} parent=67 // pred_check_branch
          %412 = sbr.rel (%p410) target = $region76
        $region75: #{net_forward.1} parent=67 // pred_region
          %414 = dma.done [#allocation6], 1024
        $region76: #{net_forward.1} parent=67 // pred_fallthru
          _
        %p415 = scmp.lt.s32.totalorder %s28, 1
        %s416 = scalar_select %p415, %s28, 1
        %s417 = smul.addr %s416, 2
        %s418 = smul.addr %s417, 8
        %s419 = scalar_lea.vmem %s0, %s418
        %p420 = pneg %p49
        %p421 = pneg %p46
        %p422 = scmp.lt.s32.totalorder %s28, 1
        %s423 = scalar_select %p422, %s28, 1
        %s424 = smul.addr %s423, 2
        %s425 = smul.addr %s424, 8
        %s426 = scalar_lea.vmem %s1, %s425
        %p427 = pneg %p75
        %p428 = pneg %p72
        %p429 = pneg %p96
        %p430 = pneg %p93
        %p431 = pneg %p117
        %p432 = pneg %p114
        %p433 = pneg %p138
        %p434 = pneg %p135
        %p435 = pneg %p159
        %p436 = pneg %p156
        %p437 = pneg %p180
        %p438 = pneg %p177
        %p439 = pneg %p201
        %p440 = pneg %p198
        %p441 = pneg %p222
        %p442 = pneg %p219
        %p443 = pneg %p243
        %p444 = pneg %p240
        %p445 = pneg %p264
        %p446 = pneg %p261
        %p447 = pneg %p285
        %p448 = pneg %p282
        %p449 = pneg %p311
        %p450 = pneg %p308
        %s451 = sand.u32 %s298, 1
        %s452 = scalar_lea.sflag [#allocation4], %s451
        %s453 = sand.u32 %s298, 1
        %s454 = scalar_lea.vmem [#allocation7], %s453
        %p455 = scmp.lt.s32.totalorder %s28, 1
        %s456 = scalar_select %p455, %s28, 1
        %s457 = smul.addr %s456, 2
        %s458 = smul.addr %s457, 8
        %s459 = scalar_lea.vmem %s0, %s458
        %p460 = scmp.lt.s32.totalorder %s28, 1
        %s461 = scalar_select %p460, %s28, 1
        %s462 = smul.addr %s461, 2
        %s463 = smul.addr %s462, 8
        %s464 = scalar_lea.vmem %s1, %s463
        %v465 = vld [vmem:[%s459] sm:$0xff]
        %v466 = vld [vmem:[%s459 + $0x8] sm:$0xff]
        %v467 = vld [vmem:[%s464] sm:$0xff]
        %v468 = vld [vmem:[%s464 + $0x8] sm:$0xff]
        %v469 = vld [vmem:[%s2] sm:$0xff]
        %v470 = vld [vmem:[%s2 + $0x8] sm:$0xff]
        %v471 = vld [vmem:[%s2 + $0x10] sm:$0xff]
        %v472 = vld [vmem:[%s2 + $0x18] sm:$0xff]
        %v473 = vld [vmem:[%s2 + $0x20] sm:$0xff]
        %v474 = vld [vmem:[%s2 + $0x28] sm:$0xff]
        %v475 = vld [vmem:[%s2 + $0x30] sm:$0xff]
        %v476 = vld [vmem:[%s2 + $0x38] sm:$0xff]
        %v477 = vld [vmem:[%s2 + $0x40] sm:$0xff]
        %v478 = vld [vmem:[%s2 + $0x48] sm:$0xff]
        %v479 = vld [vmem:[%s2 + $0x50] sm:$0xff]
        %v480 = vld [vmem:[%s2 + $0x58] sm:$0xff]
        %v481 = vld [vmem:[%s2 + $0x60] sm:$0xff]
        %v482 = vld [vmem:[%s2 + $0x68] sm:$0xff]
        %v483 = vld [vmem:[%s2 + $0x70] sm:$0xff]
        %v484 = vld [vmem:[%s2 + $0x78] sm:$0xff]
        %v485 = vld [vmem:[%s2 + $0x80] sm:$0xff]
        %v486 = vld [vmem:[%s2 + $0x88] sm:$0xff]
        %v487 = vld [vmem:[%s2 + $0x90] sm:$0xff]
        %v488 = vld [vmem:[%s2 + $0x98] sm:$0xff]
        %v489 = vld [vmem:[%s2 + $0xa0] sm:$0xff]
        %v490 = vld [vmem:[%s2 + $0xa8] sm:$0xff]
        %v491 = vld [vmem:[%s2 + $0xb0] sm:$0xff]
        %v492 = vld [vmem:[%s2 + $0xb8] sm:$0xff]
        %v493 = vld [vmem:[%s2 + $0xc0] sm:$0xff]
        %v494 = vld [vmem:[%s2 + $0xc8] sm:$0xff]
        %v495 = vld [vmem:[%s2 + $0xd0] sm:$0xff]
        %v496 = vld [vmem:[%s2 + $0xd8] sm:$0xff]
        %v497 = vld [vmem:[%s2 + $0xe0] sm:$0xff]
        %v498 = vld [vmem:[%s2 + $0xe8] sm:$0xff]
        %v499 = vld [vmem:[%s2 + $0xf0] sm:$0xff]
        %v500 = vld [vmem:[%s2 + $0xf8] sm:$0xff]
        %v501 = vld [vmem:[%s2 + $0x100] sm:$0xff]
        %v502 = vld [vmem:[%s2 + $0x108] sm:$0xff]
        %v503 = vld [vmem:[%s2 + $0x110] sm:$0xff]
        %v504 = vld [vmem:[%s2 + $0x118] sm:$0xff]
        %v505 = vld [vmem:[%s2 + $0x120] sm:$0xff]
        %v506 = vld [vmem:[%s2 + $0x128] sm:$0xff]
        %v507 = vld [vmem:[%s2 + $0x130] sm:$0xff]
        %v508 = vld [vmem:[%s2 + $0x138] sm:$0xff]
        %v509 = vld [vmem:[%s2 + $0x140] sm:$0xff]
        %v510 = vld [vmem:[%s2 + $0x148] sm:$0xff]
        %v511 = vld [vmem:[%s2 + $0x150] sm:$0xff]
        %v512 = vld [vmem:[%s2 + $0x158] sm:$0xff]
        %v513 = vld [vmem:[%s2 + $0x160] sm:$0xff]
        %v514 = vld [vmem:[%s2 + $0x168] sm:$0xff]
        %v515 = vld [vmem:[%s2 + $0x170] sm:$0xff]
        %v516 = vld [vmem:[%s2 + $0x178] sm:$0xff]
        %v517 = vld [vmem:[%s2 + $0x180] sm:$0xff]
        %v518 = vld [vmem:[%s2 + $0x188] sm:$0xff]
        %v519 = vld [vmem:[%s2 + $0x190] sm:$0xff]
        %v520 = vld [vmem:[%s2 + $0x198] sm:$0xff]
        %v521 = vld [vmem:[%s2 + $0x1a0] sm:$0xff]
        %v522 = vld [vmem:[%s2 + $0x1a8] sm:$0xff]
        %v523 = vld [vmem:[%s2 + $0x1b0] sm:$0xff]
        %v524 = vld [vmem:[%s2 + $0x1b8] sm:$0xff]
        %v525 = vld [vmem:[%s2 + $0x1c0] sm:$0xff]
        %v526 = vld [vmem:[%s2 + $0x1c8] sm:$0xff]
        %v527 = vld [vmem:[%s2 + $0x1d0] sm:$0xff]
        %v528 = vld [vmem:[%s2 + $0x1d8] sm:$0xff]
        %v529 = vld [vmem:[%s2 + $0x1e0] sm:$0xff]
        %v530 = vld [vmem:[%s2 + $0x1e8] sm:$0xff]
        %v531 = vld [vmem:[%s2 + $0x1f0] sm:$0xff]
        %v532 = vld [vmem:[%s2 + $0x1f8] sm:$0xff]
        %v533 = vld [vmem:[%s2 + $0x200] sm:$0xff]
        %v534 = vld [vmem:[%s2 + $0x208] sm:$0xff]
        %v535 = vld [vmem:[%s2 + $0x210] sm:$0xff]
        %v536 = vld [vmem:[%s2 + $0x218] sm:$0xff]
        %v537 = vld [vmem:[%s2 + $0x220] sm:$0xff]
        %v538 = vld [vmem:[%s2 + $0x228] sm:$0xff]
        %v539 = vld [vmem:[%s2 + $0x230] sm:$0xff]
        %v540 = vld [vmem:[%s2 + $0x238] sm:$0xff]
        %v541 = vld [vmem:[%s2 + $0x240] sm:$0xff]
        %v542 = vld [vmem:[%s2 + $0x248] sm:$0xff]
        %v543 = vld [vmem:[%s2 + $0x250] sm:$0xff]
        %v544 = vld [vmem:[%s2 + $0x258] sm:$0xff]
        %v545 = vld [vmem:[%s2 + $0x260] sm:$0xff]
        %v546 = vld [vmem:[%s2 + $0x268] sm:$0xff]
        %v547 = vld [vmem:[%s2 + $0x270] sm:$0xff]
        %v548 = vld [vmem:[%s2 + $0x278] sm:$0xff]
        %vm551 = vcmask 1046528
        %v552 = vrot.slane %v465, 1
        %v553 = vrot.slane %v466, 1
        %v554 = vsel %vm551, %v552, %v553
        %v559 = vrot.slane %v467, 1
        %v560 = vrot.slane %v468, 1
        %v561 = vsel %vm551, %v559, %v560
        %vm564 = vcmask 1045504
        %v565 = vrot.slane %v465, 2
        %v566 = vrot.slane %v466, 2
        %v567 = vsel %vm564, %v565, %v566
        %v570 = vpack.c.bf16 %v466, %v465
        %v571 = vpack.c.bf16 %v468, %v467
        %v572 = vpack.c.bf16 %v553, %v554
        %v573 = vpack.c.bf16 %v560, %v561
        %v574 = vpack.c.bf16 %v566, %v567
        %v655 = vunpack.c.l.b16 %v469
        %v656 = vunpack.c.h.b16 %v469
        %v657 = vunpack.c.l.b16 %v470
        %v658 = vunpack.c.h.b16 %v470
        %v659 = vunpack.c.l.b16 %v471
        %v660 = vunpack.c.h.b16 %v471
        %v661 = vunpack.c.l.b16 %v472
        %v662 = vunpack.c.h.b16 %v472
        %v663 = vunpack.c.l.b16 %v473
        %v664 = vunpack.c.h.b16 %v473
        %v665 = vunpack.c.l.b16 %v474
        %v666 = vunpack.c.h.b16 %v474
        %v667 = vunpack.c.l.b16 %v475
        %v668 = vunpack.c.h.b16 %v475
        %v669 = vunpack.c.l.b16 %v476
        %v670 = vunpack.c.h.b16 %v476
        %v671 = vunpack.c.l.b16 %v477
        %v672 = vunpack.c.h.b16 %v477
        %v673 = vunpack.c.l.b16 %v478
        %v674 = vunpack.c.h.b16 %v478
        %v675 = vunpack.c.l.b16 %v479
        %v676 = vunpack.c.h.b16 %v479
        %v677 = vunpack.c.l.b16 %v480
        %v678 = vunpack.c.h.b16 %v480
        %v679 = vunpack.c.l.b16 %v481
        %v680 = vunpack.c.h.b16 %v481
        %v681 = vunpack.c.l.b16 %v482
        %v682 = vunpack.c.h.b16 %v482
        %v683 = vunpack.c.l.b16 %v483
        %v684 = vunpack.c.h.b16 %v483
        %v685 = vunpack.c.l.b16 %v484
        %v686 = vunpack.c.h.b16 %v484
        %v687 = vunpack.c.l.b16 %v485
        %v688 = vunpack.c.h.b16 %v485
        %v689 = vunpack.c.l.b16 %v486
        %v690 = vunpack.c.h.b16 %v486
        %v691 = vunpack.c.l.b16 %v487
        %v692 = vunpack.c.h.b16 %v487
        %v693 = vunpack.c.l.b16 %v488
        %v694 = vunpack.c.h.b16 %v488
        %v695 = vunpack.c.l.b16 %v489
        %v696 = vunpack.c.h.b16 %v489
        %v697 = vunpack.c.l.b16 %v490
        %v698 = vunpack.c.h.b16 %v490
        %v699 = vunpack.c.l.b16 %v491
        %v700 = vunpack.c.h.b16 %v491
        %v701 = vunpack.c.l.b16 %v492
        %v702 = vunpack.c.h.b16 %v492
        %v703 = vunpack.c.l.b16 %v493
        %v704 = vunpack.c.h.b16 %v493
        %v705 = vunpack.c.l.b16 %v494
        %v706 = vunpack.c.h.b16 %v494
        %v707 = vunpack.c.l.b16 %v495
        %v708 = vunpack.c.h.b16 %v495
        %v709 = vunpack.c.l.b16 %v496
        %v710 = vunpack.c.h.b16 %v496
        %v711 = vunpack.c.l.b16 %v497
        %v712 = vunpack.c.h.b16 %v497
        %v713 = vunpack.c.l.b16 %v498
        %v714 = vunpack.c.h.b16 %v498
        %v715 = vunpack.c.l.b16 %v499
        %v716 = vunpack.c.h.b16 %v499
        %v717 = vunpack.c.l.b16 %v500
        %v718 = vunpack.c.h.b16 %v500
        %v719 = vunpack.c.l.b16 %v501
        %v720 = vunpack.c.h.b16 %v501
        %v721 = vunpack.c.l.b16 %v502
        %v722 = vunpack.c.h.b16 %v502
        %v723 = vunpack.c.l.b16 %v503
        %v724 = vunpack.c.h.b16 %v503
        %v725 = vunpack.c.l.b16 %v504
        %v726 = vunpack.c.h.b16 %v504
        %v727 = vunpack.c.l.b16 %v505
        %v728 = vunpack.c.h.b16 %v505
        %v729 = vunpack.c.l.b16 %v506
        %v730 = vunpack.c.h.b16 %v506
        %v731 = vunpack.c.l.b16 %v507
        %v732 = vunpack.c.h.b16 %v507
        %v733 = vunpack.c.l.b16 %v508
        %v734 = vunpack.c.h.b16 %v508
        %v735 = vunpack.c.l.b16 %v509
        %v736 = vunpack.c.h.b16 %v509
        %v737 = vunpack.c.l.b16 %v510
        %v738 = vunpack.c.h.b16 %v510
        %v739 = vunpack.c.l.b16 %v511
        %v740 = vunpack.c.h.b16 %v511
        %v741 = vunpack.c.l.b16 %v512
        %v742 = vunpack.c.h.b16 %v512
        %v743 = vunpack.c.l.b16 %v513
        %v744 = vunpack.c.h.b16 %v513
        %v745 = vunpack.c.l.b16 %v514
        %v746 = vunpack.c.h.b16 %v514
        %v747 = vunpack.c.l.b16 %v515
        %v748 = vunpack.c.h.b16 %v515
        %v749 = vunpack.c.l.b16 %v516
        %v750 = vunpack.c.h.b16 %v516
        %v751 = vunpack.c.l.b16 %v517
        %v752 = vunpack.c.h.b16 %v517
        %v753 = vunpack.c.l.b16 %v518
        %v754 = vunpack.c.h.b16 %v518
        %v755 = vunpack.c.l.b16 %v519
        %v756 = vunpack.c.h.b16 %v519
        %v757 = vunpack.c.l.b16 %v520
        %v758 = vunpack.c.h.b16 %v520
        %v759 = vunpack.c.l.b16 %v521
        %v760 = vunpack.c.h.b16 %v521
        %v761 = vunpack.c.l.b16 %v522
        %v762 = vunpack.c.h.b16 %v522
        %v763 = vunpack.c.l.b16 %v523
        %v764 = vunpack.c.h.b16 %v523
        %v765 = vunpack.c.l.b16 %v524
        %v766 = vunpack.c.h.b16 %v524
        %v767 = vunpack.c.l.b16 %v525
        %v768 = vunpack.c.h.b16 %v525
        %v769 = vunpack.c.l.b16 %v526
        %v770 = vunpack.c.h.b16 %v526
        %v771 = vunpack.c.l.b16 %v527
        %v772 = vunpack.c.h.b16 %v527
        %v773 = vunpack.c.l.b16 %v528
        %v774 = vunpack.c.h.b16 %v528
        %v775 = vunpack.c.l.b16 %v529
        %v776 = vunpack.c.h.b16 %v529
        %v777 = vunpack.c.l.b16 %v530
        %v778 = vunpack.c.h.b16 %v530
        %v779 = vunpack.c.l.b16 %v531
        %v780 = vunpack.c.h.b16 %v531
        %v781 = vunpack.c.l.b16 %v532
        %v782 = vunpack.c.h.b16 %v532
        %v783 = vunpack.c.l.b16 %v533
        %v784 = vunpack.c.h.b16 %v533
        %v785 = vunpack.c.l.b16 %v534
        %v786 = vunpack.c.h.b16 %v534
        %v787 = vunpack.c.l.b16 %v535
        %v788 = vunpack.c.h.b16 %v535
        %v789 = vunpack.c.l.b16 %v536
        %v790 = vunpack.c.h.b16 %v536
        %v791 = vunpack.c.l.b16 %v537
        %v792 = vunpack.c.h.b16 %v537
        %v793 = vunpack.c.l.b16 %v538
        %v794 = vunpack.c.h.b16 %v538
        %v795 = vunpack.c.l.b16 %v539
        %v796 = vunpack.c.h.b16 %v539
        %v797 = vunpack.c.l.b16 %v540
        %v798 = vunpack.c.h.b16 %v540
        %v799 = vunpack.c.l.b16 %v541
        %v800 = vunpack.c.h.b16 %v541
        %v801 = vunpack.c.l.b16 %v542
        %v802 = vunpack.c.h.b16 %v542
        %v803 = vunpack.c.l.b16 %v543
        %v804 = vunpack.c.h.b16 %v543
        %v805 = vunpack.c.l.b16 %v544
        %v806 = vunpack.c.h.b16 %v544
        %v807 = vunpack.c.l.b16 %v545
        %v808 = vunpack.c.h.b16 %v545
        %v809 = vunpack.c.l.b16 %v546
        %v810 = vunpack.c.h.b16 %v546
        %v811 = vunpack.c.l.b16 %v547
        %v812 = vunpack.c.h.b16 %v547
        %v813 = vunpack.c.l.b16 %v548
        %v814 = vunpack.c.h.b16 %v548
        %v815 = vpack.c.b16 %v657, %v655
        %v816 = vpack.c.b16 %v658, %v656
        %v817 = vpack.c.b16 %v661, %v659
        %v818 = vpack.c.b16 %v662, %v660
        %v819 = vpack.c.b16 %v665, %v663
        %v820 = vpack.c.b16 %v666, %v664
        %v821 = vpack.c.b16 %v669, %v667
        %v822 = vpack.c.b16 %v670, %v668
        %v823 = vpack.c.b16 %v673, %v671
        %v824 = vpack.c.b16 %v674, %v672
        %v825 = vpack.c.b16 %v677, %v675
        %v826 = vpack.c.b16 %v678, %v676
        %v827 = vpack.c.b16 %v681, %v679
        %v828 = vpack.c.b16 %v682, %v680
        %v829 = vpack.c.b16 %v685, %v683
        %v830 = vpack.c.b16 %v686, %v684
        %v831 = vpack.c.b16 %v689, %v687
        %v832 = vpack.c.b16 %v690, %v688
        %v833 = vpack.c.b16 %v693, %v691
        %v834 = vpack.c.b16 %v694, %v692
        %v835 = vpack.c.b16 %v697, %v695
        %v836 = vpack.c.b16 %v698, %v696
        %v837 = vpack.c.b16 %v701, %v699
        %v838 = vpack.c.b16 %v702, %v700
        %v839 = vpack.c.b16 %v705, %v703
        %v840 = vpack.c.b16 %v706, %v704
        %v841 = vpack.c.b16 %v709, %v707
        %v842 = vpack.c.b16 %v710, %v708
        %v843 = vpack.c.b16 %v713, %v711
        %v844 = vpack.c.b16 %v714, %v712
        %v845 = vpack.c.b16 %v717, %v715
        %v846 = vpack.c.b16 %v718, %v716
        %v847 = vpack.c.b16 %v721, %v719
        %v848 = vpack.c.b16 %v722, %v720
        %v849 = vpack.c.b16 %v725, %v723
        %v850 = vpack.c.b16 %v726, %v724
        %v851 = vpack.c.b16 %v729, %v727
        %v852 = vpack.c.b16 %v730, %v728
        %v853 = vpack.c.b16 %v733, %v731
        %v854 = vpack.c.b16 %v734, %v732
        %v855 = vpack.c.b16 %v737, %v735
        %v856 = vpack.c.b16 %v738, %v736
        %v857 = vpack.c.b16 %v741, %v739
        %v858 = vpack.c.b16 %v742, %v740
        %v859 = vpack.c.b16 %v745, %v743
        %v860 = vpack.c.b16 %v746, %v744
        %v861 = vpack.c.b16 %v749, %v747
        %v862 = vpack.c.b16 %v750, %v748
        %v863 = vpack.c.b16 %v753, %v751
        %v864 = vpack.c.b16 %v754, %v752
        %v865 = vpack.c.b16 %v757, %v755
        %v866 = vpack.c.b16 %v758, %v756
        %v867 = vpack.c.b16 %v761, %v759
        %v868 = vpack.c.b16 %v762, %v760
        %v869 = vpack.c.b16 %v765, %v763
        %v870 = vpack.c.b16 %v766, %v764
        %v871 = vpack.c.b16 %v769, %v767
        %v872 = vpack.c.b16 %v770, %v768
        %v873 = vpack.c.b16 %v773, %v771
        %v874 = vpack.c.b16 %v774, %v772
        %v875 = vpack.c.b16 %v777, %v775
        %v876 = vpack.c.b16 %v778, %v776
        %v877 = vpack.c.b16 %v781, %v779
        %v878 = vpack.c.b16 %v782, %v780
        %v879 = vpack.c.b16 %v785, %v783
        %v880 = vpack.c.b16 %v786, %v784
        %v881 = vpack.c.b16 %v789, %v787
        %v882 = vpack.c.b16 %v790, %v788
        %v883 = vpack.c.b16 %v793, %v791
        %v884 = vpack.c.b16 %v794, %v792
        %v885 = vpack.c.b16 %v797, %v795
        %v886 = vpack.c.b16 %v798, %v796
        %v887 = vpack.c.b16 %v801, %v799
        %v888 = vpack.c.b16 %v802, %v800
        %v889 = vpack.c.b16 %v805, %v803
        %v890 = vpack.c.b16 %v806, %v804
        %v891 = vpack.c.b16 %v809, %v807
        %v892 = vpack.c.b16 %v810, %v808
        %v893 = vpack.c.b16 %v813, %v811
        %v894 = vpack.c.b16 %v814, %v812
        %975 = vmatpush.bf16.msra.mxu0 %v829
        %976 = vmatpush.bf16.msra.mxu0 %v827
        %977 = vmatpush.bf16.msra.mxu0 %v825
        %978 = vmatpush.bf16.msra.mxu0 %v823
        %979 = vmatpush.bf16.msra.mxu0 %v821
        %980 = vmatpush.bf16.msra.mxu0 %v819
        %981 = vmatpush.bf16.msra.mxu0 %v817
        %982 = vmatpush.bf16.msra.mxu0 %v815
        %983 = vmatmul.bf16.gmra.mxu0 %v570
        %v984 = vpop.f32.mrf.mxu0
        %v985 = vadd.f32 0.0, %v984
        %v986 = vpop.f32.mrf.mxu0
        %v987 = vadd.f32 0.0, %v986
        %988 = vdwg.mxu0
        %989 = vmatpush.bf16.msra.mxu0 %v845
        %990 = vmatpush.bf16.msra.mxu0 %v843
        %991 = vmatpush.bf16.msra.mxu0 %v841
        %992 = vmatpush.bf16.msra.mxu0 %v839
        %993 = vmatpush.bf16.msra.mxu0 %v837
        %994 = vmatpush.bf16.msra.mxu0 %v835
        %995 = vmatpush.bf16.msra.mxu0 %v833
        %996 = vmatpush.bf16.msra.mxu0 %v831
        %997 = vmatmul.bf16.gmra.mxu0 %v571
        %v998 = vpop.f32.mrf.mxu0
        %v999 = vadd.f32 %v985, %v998
        %v1000 = vpop.f32.mrf.mxu0
        %v1001 = vadd.f32 %v987, %v1000
        %1002 = vdwg.mxu0
        %1003 = vmatpush.bf16.msra.mxu0 %v861
        %1004 = vmatpush.bf16.msra.mxu0 %v859
        %1005 = vmatpush.bf16.msra.mxu0 %v857
        %1006 = vmatpush.bf16.msra.mxu0 %v855
        %1007 = vmatpush.bf16.msra.mxu0 %v853
        %1008 = vmatpush.bf16.msra.mxu0 %v851
        %1009 = vmatpush.bf16.msra.mxu0 %v849
        %1010 = vmatpush.bf16.msra.mxu0 %v847
        %1011 = vmatmul.bf16.gmra.mxu0 %v572
        %v1012 = vpop.f32.mrf.mxu0
        %v1013 = vadd.f32 %v999, %v1012
        %v1014 = vpop.f32.mrf.mxu0
        %v1015 = vadd.f32 %v1001, %v1014
        %1016 = vdwg.mxu0
        %1017 = vmatpush.bf16.msra.mxu0 %v877
        %1018 = vmatpush.bf16.msra.mxu0 %v875
        %1019 = vmatpush.bf16.msra.mxu0 %v873
        %1020 = vmatpush.bf16.msra.mxu0 %v871
        %1021 = vmatpush.bf16.msra.mxu0 %v869
        %1022 = vmatpush.bf16.msra.mxu0 %v867
        %1023 = vmatpush.bf16.msra.mxu0 %v865
        %1024 = vmatpush.bf16.msra.mxu0 %v863
        %1025 = vmatmul.bf16.gmra.mxu0 %v573
        %v1026 = vpop.f32.mrf.mxu0
        %v1027 = vadd.f32 %v1013, %v1026
        %v1028 = vpop.f32.mrf.mxu0
        %v1029 = vadd.f32 %v1015, %v1028
        %1030 = vdwg.mxu0
        %1031 = vmatpush.bf16.msra.mxu0 %v893
        %1032 = vmatpush.bf16.msra.mxu0 %v891
        %1033 = vmatpush.bf16.msra.mxu0 %v889
        %1034 = vmatpush.bf16.msra.mxu0 %v887
        %1035 = vmatpush.bf16.msra.mxu0 %v885
        %1036 = vmatpush.bf16.msra.mxu0 %v883
        %1037 = vmatpush.bf16.msra.mxu0 %v881
        %1038 = vmatpush.bf16.msra.mxu0 %v879
        %1039 = vmatmul.bf16.gmra.mxu0 %v574
        %v1040 = vpop.f32.mrf.mxu0
        %v1041 = vadd.f32 %v1027, %v1040
        %v1042 = vpop.f32.mrf.mxu0
        %v1043 = vadd.f32 %v1029, %v1042
        %1044 = vdwg.mxu0
        %1045 = vmatpush.bf16.msra.mxu0 %v830
        %1046 = vmatpush.bf16.msra.mxu0 %v828
        %1047 = vmatpush.bf16.msra.mxu0 %v826
        %1048 = vmatpush.bf16.msra.mxu0 %v824
        %1049 = vmatpush.bf16.msra.mxu0 %v822
        %1050 = vmatpush.bf16.msra.mxu0 %v820
        %1051 = vmatpush.bf16.msra.mxu0 %v818
        %1052 = vmatpush.bf16.msra.mxu0 %v816
        %1053 = vmatmul.bf16.gmra.mxu0 %v570
        %v1054 = vpop.f32.mrf.mxu0
        %v1055 = vadd.f32 0.0, %v1054
        %v1056 = vpop.f32.mrf.mxu0
        %v1057 = vadd.f32 0.0, %v1056
        %1058 = vdwg.mxu0
        %1059 = vmatpush.bf16.msra.mxu0 %v846
        %1060 = vmatpush.bf16.msra.mxu0 %v844
        %1061 = vmatpush.bf16.msra.mxu0 %v842
        %1062 = vmatpush.bf16.msra.mxu0 %v840
        %1063 = vmatpush.bf16.msra.mxu0 %v838
        %1064 = vmatpush.bf16.msra.mxu0 %v836
        %1065 = vmatpush.bf16.msra.mxu0 %v834
        %1066 = vmatpush.bf16.msra.mxu0 %v832
        %1067 = vmatmul.bf16.gmra.mxu0 %v571
        %v1068 = vpop.f32.mrf.mxu0
        %v1069 = vadd.f32 %v1055, %v1068
        %v1070 = vpop.f32.mrf.mxu0
        %v1071 = vadd.f32 %v1057, %v1070
        %1072 = vdwg.mxu0
        %1073 = vmatpush.bf16.msra.mxu0 %v862
        %1074 = vmatpush.bf16.msra.mxu0 %v860
        %1075 = vmatpush.bf16.msra.mxu0 %v858
        %1076 = vmatpush.bf16.msra.mxu0 %v856
        %1077 = vmatpush.bf16.msra.mxu0 %v854
        %1078 = vmatpush.bf16.msra.mxu0 %v852
        %1079 = vmatpush.bf16.msra.mxu0 %v850
        %1080 = vmatpush.bf16.msra.mxu0 %v848
        %1081 = vmatmul.bf16.gmra.mxu0 %v572
        %v1082 = vpop.f32.mrf.mxu0
        %v1083 = vadd.f32 %v1069, %v1082
        %v1084 = vpop.f32.mrf.mxu0
        %v1085 = vadd.f32 %v1071, %v1084
        %1086 = vdwg.mxu0
        %1087 = vmatpush.bf16.msra.mxu0 %v878
        %1088 = vmatpush.bf16.msra.mxu0 %v876
        %1089 = vmatpush.bf16.msra.mxu0 %v874
        %1090 = vmatpush.bf16.msra.mxu0 %v872
        %1091 = vmatpush.bf16.msra.mxu0 %v870
        %1092 = vmatpush.bf16.msra.mxu0 %v868
        %1093 = vmatpush.bf16.msra.mxu0 %v866
        %1094 = vmatpush.bf16.msra.mxu0 %v864
        %1095 = vmatmul.bf16.gmra.mxu0 %v573
        %v1096 = vpop.f32.mrf.mxu0
        %v1097 = vadd.f32 %v1083, %v1096
        %v1098 = vpop.f32.mrf.mxu0
        %v1099 = vadd.f32 %v1085, %v1098
        %1100 = vdwg.mxu0
        %1101 = vmatpush.bf16.msra.mxu0 %v894
        %1102 = vmatpush.bf16.msra.mxu0 %v892
        %1103 = vmatpush.bf16.msra.mxu0 %v890
        %1104 = vmatpush.bf16.msra.mxu0 %v888
        %1105 = vmatpush.bf16.msra.mxu0 %v886
        %1106 = vmatpush.bf16.msra.mxu0 %v884
        %1107 = vmatpush.bf16.msra.mxu0 %v882
        %1108 = vmatpush.bf16.msra.mxu0 %v880
        %1109 = vmatmul.bf16.gmra.mxu0 %v574
        %v1110 = vpop.f32.mrf.mxu0
        %v1111 = vadd.f32 %v1097, %v1110
        %v1112 = vpop.f32.mrf.mxu0
        %v1113 = vadd.f32 %v1099, %v1112
        %1114 = vdwg.mxu0
        %v1115 = vmax.f32 %v1041, %v1111
        %v1116 = vmax.f32 %v1043, %v1113
        %v1117 = vrot.slane %v467, 2
        %v1118 = vrot.slane %v468, 2
        %v1119 = vsel %vm564, %v1117, %v1118
        %v1122 = vpack.c.bf16 %v1118, %v1119
        %1123 = vmatpush.bf16.msra.mxu0 %v829
        %1124 = vmatpush.bf16.msra.mxu0 %v827
        %1125 = vmatpush.bf16.msra.mxu0 %v825
        %1126 = vmatpush.bf16.msra.mxu0 %v823
        %1127 = vmatpush.bf16.msra.mxu0 %v821
        %1128 = vmatpush.bf16.msra.mxu0 %v819
        %1129 = vmatpush.bf16.msra.mxu0 %v817
        %1130 = vmatpush.bf16.msra.mxu0 %v815
        %1131 = vmatmul.bf16.gmra.mxu0 %v571
        %v1132 = vpop.f32.mrf.mxu0
        %v1133 = vadd.f32 0.0, %v1132
        %v1134 = vpop.f32.mrf.mxu0
        %v1135 = vadd.f32 0.0, %v1134
        %1136 = vdwg.mxu0
        %1137 = vmatpush.bf16.msra.mxu0 %v845
        %1138 = vmatpush.bf16.msra.mxu0 %v843
        %1139 = vmatpush.bf16.msra.mxu0 %v841
        %1140 = vmatpush.bf16.msra.mxu0 %v839
        %1141 = vmatpush.bf16.msra.mxu0 %v837
        %1142 = vmatpush.bf16.msra.mxu0 %v835
        %1143 = vmatpush.bf16.msra.mxu0 %v833
        %1144 = vmatpush.bf16.msra.mxu0 %v831
        %1145 = vmatmul.bf16.gmra.mxu0 %v572
        %v1146 = vpop.f32.mrf.mxu0
        %v1147 = vadd.f32 %v1133, %v1146
        %v1148 = vpop.f32.mrf.mxu0
        %v1149 = vadd.f32 %v1135, %v1148
        %1150 = vdwg.mxu0
        %1151 = vmatpush.bf16.msra.mxu0 %v861
        %1152 = vmatpush.bf16.msra.mxu0 %v859
        %1153 = vmatpush.bf16.msra.mxu0 %v857
        %1154 = vmatpush.bf16.msra.mxu0 %v855
        %1155 = vmatpush.bf16.msra.mxu0 %v853
        %1156 = vmatpush.bf16.msra.mxu0 %v851
        %1157 = vmatpush.bf16.msra.mxu0 %v849
        %1158 = vmatpush.bf16.msra.mxu0 %v847
        %1159 = vmatmul.bf16.gmra.mxu0 %v573
        %v1160 = vpop.f32.mrf.mxu0
        %v1161 = vadd.f32 %v1147, %v1160
        %v1162 = vpop.f32.mrf.mxu0
        %v1163 = vadd.f32 %v1149, %v1162
        %1164 = vdwg.mxu0
        %1165 = vmatpush.bf16.msra.mxu0 %v877
        %1166 = vmatpush.bf16.msra.mxu0 %v875
        %1167 = vmatpush.bf16.msra.mxu0 %v873
        %1168 = vmatpush.bf16.msra.mxu0 %v871
        %1169 = vmatpush.bf16.msra.mxu0 %v869
        %1170 = vmatpush.bf16.msra.mxu0 %v867
        %1171 = vmatpush.bf16.msra.mxu0 %v865
        %1172 = vmatpush.bf16.msra.mxu0 %v863
        %1173 = vmatmul.bf16.gmra.mxu0 %v574
        %v1174 = vpop.f32.mrf.mxu0
        %v1175 = vadd.f32 %v1161, %v1174
        %v1176 = vpop.f32.mrf.mxu0
        %v1177 = vadd.f32 %v1163, %v1176
        %1178 = vdwg.mxu0
        %1179 = vmatpush.bf16.msra.mxu0 %v893
        %1180 = vmatpush.bf16.msra.mxu0 %v891
        %1181 = vmatpush.bf16.msra.mxu0 %v889
        %1182 = vmatpush.bf16.msra.mxu0 %v887
        %1183 = vmatpush.bf16.msra.mxu0 %v885
        %1184 = vmatpush.bf16.msra.mxu0 %v883
        %1185 = vmatpush.bf16.msra.mxu0 %v881
        %1186 = vmatpush.bf16.msra.mxu0 %v879
        %1187 = vmatmul.bf16.gmra.mxu0 %v1122
        %v1188 = vpop.f32.mrf.mxu0
        %v1189 = vadd.f32 %v1175, %v1188
        %v1190 = vpop.f32.mrf.mxu0
        %v1191 = vadd.f32 %v1177, %v1190
        %1192 = vdwg.mxu0
        %1193 = vmatpush.bf16.msra.mxu0 %v830
        %1194 = vmatpush.bf16.msra.mxu0 %v828
        %1195 = vmatpush.bf16.msra.mxu0 %v826
        %1196 = vmatpush.bf16.msra.mxu0 %v824
        %1197 = vmatpush.bf16.msra.mxu0 %v822
        %1198 = vmatpush.bf16.msra.mxu0 %v820
        %1199 = vmatpush.bf16.msra.mxu0 %v818
        %1200 = vmatpush.bf16.msra.mxu0 %v816
        %1201 = vmatmul.bf16.gmra.mxu0 %v571
        %v1202 = vpop.f32.mrf.mxu0
        %v1203 = vadd.f32 0.0, %v1202
        %v1204 = vpop.f32.mrf.mxu0
        %v1205 = vadd.f32 0.0, %v1204
        %1206 = vdwg.mxu0
        %1207 = vmatpush.bf16.msra.mxu0 %v846
        %1208 = vmatpush.bf16.msra.mxu0 %v844
        %1209 = vmatpush.bf16.msra.mxu0 %v842
        %1210 = vmatpush.bf16.msra.mxu0 %v840
        %1211 = vmatpush.bf16.msra.mxu0 %v838
        %1212 = vmatpush.bf16.msra.mxu0 %v836
        %1213 = vmatpush.bf16.msra.mxu0 %v834
        %1214 = vmatpush.bf16.msra.mxu0 %v832
        %1215 = vmatmul.bf16.gmra.mxu0 %v572
        %v1216 = vpop.f32.mrf.mxu0
        %v1217 = vadd.f32 %v1203, %v1216
        %v1218 = vpop.f32.mrf.mxu0
        %v1219 = vadd.f32 %v1205, %v1218
        %1220 = vdwg.mxu0
        %1221 = vmatpush.bf16.msra.mxu0 %v862
        %1222 = vmatpush.bf16.msra.mxu0 %v860
        %1223 = vmatpush.bf16.msra.mxu0 %v858
        %1224 = vmatpush.bf16.msra.mxu0 %v856
        %1225 = vmatpush.bf16.msra.mxu0 %v854
        %1226 = vmatpush.bf16.msra.mxu0 %v852
        %1227 = vmatpush.bf16.msra.mxu0 %v850
        %1228 = vmatpush.bf16.msra.mxu0 %v848
        %1229 = vmatmul.bf16.gmra.mxu0 %v573
        %v1230 = vpop.f32.mrf.mxu0
        %v1231 = vadd.f32 %v1217, %v1230
        %v1232 = vpop.f32.mrf.mxu0
        %v1233 = vadd.f32 %v1219, %v1232
        %1234 = vdwg.mxu0
        %1235 = vmatpush.bf16.msra.mxu0 %v878
        %1236 = vmatpush.bf16.msra.mxu0 %v876
        %1237 = vmatpush.bf16.msra.mxu0 %v874
        %1238 = vmatpush.bf16.msra.mxu0 %v872
        %1239 = vmatpush.bf16.msra.mxu0 %v870
        %1240 = vmatpush.bf16.msra.mxu0 %v868
        %1241 = vmatpush.bf16.msra.mxu0 %v866
        %1242 = vmatpush.bf16.msra.mxu0 %v864
        %1243 = vmatmul.bf16.gmra.mxu0 %v574
        %v1244 = vpop.f32.mrf.mxu0
        %v1245 = vadd.f32 %v1231, %v1244
        %v1246 = vpop.f32.mrf.mxu0
        %v1247 = vadd.f32 %v1233, %v1246
        %1248 = vdwg.mxu0
        %1249 = vmatpush.bf16.msra.mxu0 %v894
        %1250 = vmatpush.bf16.msra.mxu0 %v892
        %1251 = vmatpush.bf16.msra.mxu0 %v890
        %1252 = vmatpush.bf16.msra.mxu0 %v888
        %1253 = vmatpush.bf16.msra.mxu0 %v886
        %1254 = vmatpush.bf16.msra.mxu0 %v884
        %1255 = vmatpush.bf16.msra.mxu0 %v882
        %1256 = vmatpush.bf16.msra.mxu0 %v880
        %1257 = vmatmul.bf16.gmra.mxu0 %v1122
        %v1258 = vpop.f32.mrf.mxu0
        %v1259 = vadd.f32 %v1245, %v1258
        %v1260 = vpop.f32.mrf.mxu0
        %v1261 = vadd.f32 %v1247, %v1260
        %1262 = vdwg.mxu0
        %v1263 = vmax.f32 %v1189, %v1259
        %v1264 = vmax.f32 %v1191, %v1261
        %v1265 = vmax.f32 %v1115, %v1263
        %v1266 = vmax.f32 %v1116, %v1264
        %v1267 = vld [vmem:[%s3] sm:$0x1]
        %v1269 = vperm.slane %v1267, 0
        %v1271 = vadd.f32 %v1265, %v1269
        %v1272 = vadd.f32 %v1266, %v1269
        %v1273 = vmax.f32 %v1271, 0.0
        %v1274 = vmax.f32 %v1272, 0.0
        %v1275 = vld [vmem:[#allocation2] sm:$0xff]
        %v1276 = vld [vmem:[#allocation2 + $0x8] sm:$0xff]
        %v1277 = vld [vmem:[#allocation2 + $0x10] sm:$0xff]
        %v1278 = vld [vmem:[#allocation2 + $0x18] sm:$0xff]
        %v1279 = vld [vmem:[#allocation2 + $0x20] sm:$0xff]
        %v1280 = vld [vmem:[#allocation2 + $0x28] sm:$0xff]
        %v1281 = vld [vmem:[#allocation2 + $0x30] sm:$0xff]
        %v1282 = vld [vmem:[#allocation2 + $0x38] sm:$0xff]
        %v1283 = vld [vmem:[#allocation2 + $0x40] sm:$0xff]
        %v1284 = vld [vmem:[#allocation2 + $0x48] sm:$0xff]
        %v1285 = vld [vmem:[#allocation2 + $0x50] sm:$0xff]
        %v1286 = vld [vmem:[#allocation2 + $0x58] sm:$0xff]
        %v1287 = vld [vmem:[#allocation2 + $0x60] sm:$0xff]
        %v1288 = vld [vmem:[#allocation2 + $0x68] sm:$0xff]
        %v1289 = vld [vmem:[#allocation2 + $0x70] sm:$0xff]
        %v1290 = vld [vmem:[#allocation2 + $0x78] sm:$0xff]
        %v1291 = vld [vmem:[#allocation2 + $0x80] sm:$0xff]
        %v1292 = vld [vmem:[#allocation2 + $0x88] sm:$0xff]
        %v1293 = vld [vmem:[#allocation2 + $0x90] sm:$0xff]
        %v1294 = vld [vmem:[#allocation2 + $0x98] sm:$0xff]
        %v1295 = vld [vmem:[#allocation2 + $0xa0] sm:$0xff]
        %v1296 = vld [vmem:[#allocation2 + $0xa8] sm:$0xff]
        %v1297 = vld [vmem:[#allocation2 + $0xb0] sm:$0xff]
        %v1298 = vld [vmem:[#allocation2 + $0xb8] sm:$0xff]
        %v1299 = vld [vmem:[#allocation2 + $0xc0] sm:$0xff]
        %v1300 = vld [vmem:[#allocation2 + $0xc8] sm:$0xff]
        %v1301 = vld [vmem:[#allocation2 + $0xd0] sm:$0xff]
        %v1302 = vld [vmem:[#allocation2 + $0xd8] sm:$0xff]
        %v1303 = vld [vmem:[#allocation2 + $0xe0] sm:$0xff]
        %v1304 = vld [vmem:[#allocation2 + $0xe8] sm:$0xff]
        %v1305 = vld [vmem:[#allocation2 + $0xf0] sm:$0xff]
        %v1306 = vld [vmem:[#allocation2 + $0xf8] sm:$0xff]
        %v1307 = vld [vmem:[#allocation2 + $0x100] sm:$0xff]
        %v1308 = vld [vmem:[#allocation2 + $0x108] sm:$0xff]
        %v1309 = vld [vmem:[#allocation2 + $0x110] sm:$0xff]
        %v1310 = vld [vmem:[#allocation2 + $0x118] sm:$0xff]
        %v1311 = vld [vmem:[#allocation2 + $0x120] sm:$0xff]
        %v1312 = vld [vmem:[#allocation2 + $0x128] sm:$0xff]
        %v1313 = vld [vmem:[#allocation2 + $0x130] sm:$0xff]
        %v1314 = vld [vmem:[#allocation2 + $0x138] sm:$0xff]
        %v1315 = vld [vmem:[#allocation2 + $0x140] sm:$0xff]
        %v1316 = vld [vmem:[#allocation2 + $0x148] sm:$0xff]
        %v1317 = vld [vmem:[#allocation2 + $0x150] sm:$0xff]
        %v1318 = vld [vmem:[#allocation2 + $0x158] sm:$0xff]
        %v1319 = vld [vmem:[#allocation2 + $0x160] sm:$0xff]
        %v1320 = vld [vmem:[#allocation2 + $0x168] sm:$0xff]
        %v1321 = vld [vmem:[#allocation2 + $0x170] sm:$0xff]
        %v1322 = vld [vmem:[#allocation2 + $0x178] sm:$0xff]
        %v1323 = vld [vmem:[#allocation2 + $0x180] sm:$0xff]
        %v1324 = vld [vmem:[#allocation2 + $0x188] sm:$0xff]
        %v1325 = vld [vmem:[#allocation2 + $0x190] sm:$0xff]
        %v1326 = vld [vmem:[#allocation2 + $0x198] sm:$0xff]
        %v1327 = vld [vmem:[#allocation2 + $0x1a0] sm:$0xff]
        %v1328 = vld [vmem:[#allocation2 + $0x1a8] sm:$0xff]
        %v1329 = vld [vmem:[#allocation2 + $0x1b0] sm:$0xff]
        %v1330 = vld [vmem:[#allocation2 + $0x1b8] sm:$0xff]
        %v1331 = vld [vmem:[#allocation2 + $0x1c0] sm:$0xff]
        %v1332 = vld [vmem:[#allocation2 + $0x1c8] sm:$0xff]
        %v1333 = vld [vmem:[#allocation2 + $0x1d0] sm:$0xff]
        %v1334 = vld [vmem:[#allocation2 + $0x1d8] sm:$0xff]
        %v1335 = vld [vmem:[#allocation2 + $0x1e0] sm:$0xff]
        %v1336 = vld [vmem:[#allocation2 + $0x1e8] sm:$0xff]
        %v1337 = vld [vmem:[#allocation2 + $0x1f0] sm:$0xff]
        %v1338 = vld [vmem:[#allocation2 + $0x1f8] sm:$0xff]
        %v1339 = vld [vmem:[#allocation2 + $0x200] sm:$0xff]
        %v1340 = vld [vmem:[#allocation2 + $0x208] sm:$0xff]
        %v1341 = vld [vmem:[#allocation2 + $0x210] sm:$0xff]
        %v1342 = vld [vmem:[#allocation2 + $0x218] sm:$0xff]
        %v1343 = vld [vmem:[#allocation2 + $0x220] sm:$0xff]
        %v1344 = vld [vmem:[#allocation2 + $0x228] sm:$0xff]
        %v1345 = vld [vmem:[#allocation2 + $0x230] sm:$0xff]
        %v1346 = vld [vmem:[#allocation2 + $0x238] sm:$0xff]
        %v1347 = vld [vmem:[#allocation2 + $0x240] sm:$0xff]
        %v1348 = vld [vmem:[#allocation2 + $0x248] sm:$0xff]
        %v1349 = vld [vmem:[#allocation2 + $0x250] sm:$0xff]
        %v1350 = vld [vmem:[#allocation2 + $0x258] sm:$0xff]
        %v1351 = vld [vmem:[#allocation2 + $0x260] sm:$0xff]
        %v1352 = vld [vmem:[#allocation2 + $0x268] sm:$0xff]
        %v1353 = vld [vmem:[#allocation2 + $0x270] sm:$0xff]
        %v1354 = vld [vmem:[#allocation2 + $0x278] sm:$0xff]
        %v1357 = vrot.slane %v1273, 1
        %v1358 = vrot.slane %v1274, 1
        %v1359 = vsel %vm551, %v1357, %v1358
        %v1362 = vrot.slane %v1273, 2
        %v1363 = vrot.slane %v1274, 2
        %v1364 = vsel %vm564, %v1362, %v1363
        %vm1367 = vcmask 1044480
        %v1368 = vrot.slane %v1273, 3
        %v1369 = vrot.slane %v1274, 3
        %v1370 = vsel %vm1367, %v1368, %v1369
        %vm1373 = vcmask 1043456
        %v1374 = vrot.slane %v1273, 4
        %v1375 = vrot.slane %v1274, 4
        %v1376 = vsel %vm1373, %v1374, %v1375
        %v1379 = vpack.c.bf16 %v1274, %v1273
        %v1380 = vpack.c.bf16 %v1358, %v1359
        %v1381 = vpack.c.bf16 %v1363, %v1364
        %v1382 = vpack.c.bf16 %v1369, %v1370
        %v1383 = vpack.c.bf16 %v1375, %v1376
        %v1464 = vunpack.c.l.b16 %v1275
        %v1465 = vunpack.c.h.b16 %v1275
        %v1466 = vunpack.c.l.b16 %v1276
        %v1467 = vunpack.c.h.b16 %v1276
        %v1468 = vunpack.c.l.b16 %v1277
        %v1469 = vunpack.c.h.b16 %v1277
        %v1470 = vunpack.c.l.b16 %v1278
        %v1471 = vunpack.c.h.b16 %v1278
        %v1472 = vunpack.c.l.b16 %v1279
        %v1473 = vunpack.c.h.b16 %v1279
        %v1474 = vunpack.c.l.b16 %v1280
        %v1475 = vunpack.c.h.b16 %v1280
        %v1476 = vunpack.c.l.b16 %v1281
        %v1477 = vunpack.c.h.b16 %v1281
        %v1478 = vunpack.c.l.b16 %v1282
        %v1479 = vunpack.c.h.b16 %v1282
        %v1480 = vunpack.c.l.b16 %v1283
        %v1481 = vunpack.c.h.b16 %v1283
        %v1482 = vunpack.c.l.b16 %v1284
        %v1483 = vunpack.c.h.b16 %v1284
        %v1484 = vunpack.c.l.b16 %v1285
        %v1485 = vunpack.c.h.b16 %v1285
        %v1486 = vunpack.c.l.b16 %v1286
        %v1487 = vunpack.c.h.b16 %v1286
        %v1488 = vunpack.c.l.b16 %v1287
        %v1489 = vunpack.c.h.b16 %v1287
        %v1490 = vunpack.c.l.b16 %v1288
        %v1491 = vunpack.c.h.b16 %v1288
        %v1492 = vunpack.c.l.b16 %v1289
        %v1493 = vunpack.c.h.b16 %v1289
        %v1494 = vunpack.c.l.b16 %v1290
        %v1495 = vunpack.c.h.b16 %v1290
        %v1496 = vunpack.c.l.b16 %v1291
        %v1497 = vunpack.c.h.b16 %v1291
        %v1498 = vunpack.c.l.b16 %v1292
        %v1499 = vunpack.c.h.b16 %v1292
        %v1500 = vunpack.c.l.b16 %v1293
        %v1501 = vunpack.c.h.b16 %v1293
        %v1502 = vunpack.c.l.b16 %v1294
        %v1503 = vunpack.c.h.b16 %v1294
        %v1504 = vunpack.c.l.b16 %v1295
        %v1505 = vunpack.c.h.b16 %v1295
        %v1506 = vunpack.c.l.b16 %v1296
        %v1507 = vunpack.c.h.b16 %v1296
        %v1508 = vunpack.c.l.b16 %v1297
        %v1509 = vunpack.c.h.b16 %v1297
        %v1510 = vunpack.c.l.b16 %v1298
        %v1511 = vunpack.c.h.b16 %v1298
        %v1512 = vunpack.c.l.b16 %v1299
        %v1513 = vunpack.c.h.b16 %v1299
        %v1514 = vunpack.c.l.b16 %v1300
        %v1515 = vunpack.c.h.b16 %v1300
        %v1516 = vunpack.c.l.b16 %v1301
        %v1517 = vunpack.c.h.b16 %v1301
        %v1518 = vunpack.c.l.b16 %v1302
        %v1519 = vunpack.c.h.b16 %v1302
        %v1520 = vunpack.c.l.b16 %v1303
        %v1521 = vunpack.c.h.b16 %v1303
        %v1522 = vunpack.c.l.b16 %v1304
        %v1523 = vunpack.c.h.b16 %v1304
        %v1524 = vunpack.c.l.b16 %v1305
        %v1525 = vunpack.c.h.b16 %v1305
        %v1526 = vunpack.c.l.b16 %v1306
        %v1527 = vunpack.c.h.b16 %v1306
        %v1528 = vunpack.c.l.b16 %v1307
        %v1529 = vunpack.c.h.b16 %v1307
        %v1530 = vunpack.c.l.b16 %v1308
        %v1531 = vunpack.c.h.b16 %v1308
        %v1532 = vunpack.c.l.b16 %v1309
        %v1533 = vunpack.c.h.b16 %v1309
        %v1534 = vunpack.c.l.b16 %v1310
        %v1535 = vunpack.c.h.b16 %v1310
        %v1536 = vunpack.c.l.b16 %v1311
        %v1537 = vunpack.c.h.b16 %v1311
        %v1538 = vunpack.c.l.b16 %v1312
        %v1539 = vunpack.c.h.b16 %v1312
        %v1540 = vunpack.c.l.b16 %v1313
        %v1541 = vunpack.c.h.b16 %v1313
        %v1542 = vunpack.c.l.b16 %v1314
        %v1543 = vunpack.c.h.b16 %v1314
        %v1544 = vunpack.c.l.b16 %v1315
        %v1545 = vunpack.c.h.b16 %v1315
        %v1546 = vunpack.c.l.b16 %v1316
        %v1547 = vunpack.c.h.b16 %v1316
        %v1548 = vunpack.c.l.b16 %v1317
        %v1549 = vunpack.c.h.b16 %v1317
        %v1550 = vunpack.c.l.b16 %v1318
        %v1551 = vunpack.c.h.b16 %v1318
        %v1552 = vunpack.c.l.b16 %v1319
        %v1553 = vunpack.c.h.b16 %v1319
        %v1554 = vunpack.c.l.b16 %v1320
        %v1555 = vunpack.c.h.b16 %v1320
        %v1556 = vunpack.c.l.b16 %v1321
        %v1557 = vunpack.c.h.b16 %v1321
        %v1558 = vunpack.c.l.b16 %v1322
        %v1559 = vunpack.c.h.b16 %v1322
        %v1560 = vunpack.c.l.b16 %v1323
        %v1561 = vunpack.c.h.b16 %v1323
        %v1562 = vunpack.c.l.b16 %v1324
        %v1563 = vunpack.c.h.b16 %v1324
        %v1564 = vunpack.c.l.b16 %v1325
        %v1565 = vunpack.c.h.b16 %v1325
        %v1566 = vunpack.c.l.b16 %v1326
        %v1567 = vunpack.c.h.b16 %v1326
        %v1568 = vunpack.c.l.b16 %v1327
        %v1569 = vunpack.c.h.b16 %v1327
        %v1570 = vunpack.c.l.b16 %v1328
        %v1571 = vunpack.c.h.b16 %v1328
        %v1572 = vunpack.c.l.b16 %v1329
        %v1573 = vunpack.c.h.b16 %v1329
        %v1574 = vunpack.c.l.b16 %v1330
        %v1575 = vunpack.c.h.b16 %v1330
        %v1576 = vunpack.c.l.b16 %v1331
        %v1577 = vunpack.c.h.b16 %v1331
        %v1578 = vunpack.c.l.b16 %v1332
        %v1579 = vunpack.c.h.b16 %v1332
        %v1580 = vunpack.c.l.b16 %v1333
        %v1581 = vunpack.c.h.b16 %v1333
        %v1582 = vunpack.c.l.b16 %v1334
        %v1583 = vunpack.c.h.b16 %v1334
        %v1584 = vunpack.c.l.b16 %v1335
        %v1585 = vunpack.c.h.b16 %v1335
        %v1586 = vunpack.c.l.b16 %v1336
        %v1587 = vunpack.c.h.b16 %v1336
        %v1588 = vunpack.c.l.b16 %v1337
        %v1589 = vunpack.c.h.b16 %v1337
        %v1590 = vunpack.c.l.b16 %v1338
        %v1591 = vunpack.c.h.b16 %v1338
        %v1592 = vunpack.c.l.b16 %v1339
        %v1593 = vunpack.c.h.b16 %v1339
        %v1594 = vunpack.c.l.b16 %v1340
        %v1595 = vunpack.c.h.b16 %v1340
        %v1596 = vunpack.c.l.b16 %v1341
        %v1597 = vunpack.c.h.b16 %v1341
        %v1598 = vunpack.c.l.b16 %v1342
        %v1599 = vunpack.c.h.b16 %v1342
        %v1600 = vunpack.c.l.b16 %v1343
        %v1601 = vunpack.c.h.b16 %v1343
        %v1602 = vunpack.c.l.b16 %v1344
        %v1603 = vunpack.c.h.b16 %v1344
        %v1604 = vunpack.c.l.b16 %v1345
        %v1605 = vunpack.c.h.b16 %v1345
        %v1606 = vunpack.c.l.b16 %v1346
        %v1607 = vunpack.c.h.b16 %v1346
        %v1608 = vunpack.c.l.b16 %v1347
        %v1609 = vunpack.c.h.b16 %v1347
        %v1610 = vunpack.c.l.b16 %v1348
        %v1611 = vunpack.c.h.b16 %v1348
        %v1612 = vunpack.c.l.b16 %v1349
        %v1613 = vunpack.c.h.b16 %v1349
        %v1614 = vunpack.c.l.b16 %v1350
        %v1615 = vunpack.c.h.b16 %v1350
        %v1616 = vunpack.c.l.b16 %v1351
        %v1617 = vunpack.c.h.b16 %v1351
        %v1618 = vunpack.c.l.b16 %v1352
        %v1619 = vunpack.c.h.b16 %v1352
        %v1620 = vunpack.c.l.b16 %v1353
        %v1621 = vunpack.c.h.b16 %v1353
        %v1622 = vunpack.c.l.b16 %v1354
        %v1623 = vunpack.c.h.b16 %v1354
        %v1624 = vpack.c.b16 %v1466, %v1464
        %v1625 = vpack.c.b16 %v1467, %v1465
        %v1626 = vpack.c.b16 %v1470, %v1468
        %v1627 = vpack.c.b16 %v1471, %v1469
        %v1628 = vpack.c.b16 %v1474, %v1472
        %v1629 = vpack.c.b16 %v1475, %v1473
        %v1630 = vpack.c.b16 %v1478, %v1476
        %v1631 = vpack.c.b16 %v1479, %v1477
        %v1632 = vpack.c.b16 %v1482, %v1480
        %v1633 = vpack.c.b16 %v1483, %v1481
        %v1634 = vpack.c.b16 %v1486, %v1484
        %v1635 = vpack.c.b16 %v1487, %v1485
        %v1636 = vpack.c.b16 %v1490, %v1488
        %v1637 = vpack.c.b16 %v1491, %v1489
        %v1638 = vpack.c.b16 %v1494, %v1492
        %v1639 = vpack.c.b16 %v1495, %v1493
        %v1640 = vpack.c.b16 %v1498, %v1496
        %v1641 = vpack.c.b16 %v1499, %v1497
        %v1642 = vpack.c.b16 %v1502, %v1500
        %v1643 = vpack.c.b16 %v1503, %v1501
        %v1644 = vpack.c.b16 %v1506, %v1504
        %v1645 = vpack.c.b16 %v1507, %v1505
        %v1646 = vpack.c.b16 %v1510, %v1508
        %v1647 = vpack.c.b16 %v1511, %v1509
        %v1648 = vpack.c.b16 %v1514, %v1512
        %v1649 = vpack.c.b16 %v1515, %v1513
        %v1650 = vpack.c.b16 %v1518, %v1516
        %v1651 = vpack.c.b16 %v1519, %v1517
        %v1652 = vpack.c.b16 %v1522, %v1520
        %v1653 = vpack.c.b16 %v1523, %v1521
        %v1654 = vpack.c.b16 %v1526, %v1524
        %v1655 = vpack.c.b16 %v1527, %v1525
        %v1656 = vpack.c.b16 %v1530, %v1528
        %v1657 = vpack.c.b16 %v1531, %v1529
        %v1658 = vpack.c.b16 %v1534, %v1532
        %v1659 = vpack.c.b16 %v1535, %v1533
        %v1660 = vpack.c.b16 %v1538, %v1536
        %v1661 = vpack.c.b16 %v1539, %v1537
        %v1662 = vpack.c.b16 %v1542, %v1540
        %v1663 = vpack.c.b16 %v1543, %v1541
        %v1664 = vpack.c.b16 %v1546, %v1544
        %v1665 = vpack.c.b16 %v1547, %v1545
        %v1666 = vpack.c.b16 %v1550, %v1548
        %v1667 = vpack.c.b16 %v1551, %v1549
        %v1668 = vpack.c.b16 %v1554, %v1552
        %v1669 = vpack.c.b16 %v1555, %v1553
        %v1670 = vpack.c.b16 %v1558, %v1556
        %v1671 = vpack.c.b16 %v1559, %v1557
        %v1672 = vpack.c.b16 %v1562, %v1560
        %v1673 = vpack.c.b16 %v1563, %v1561
        %v1674 = vpack.c.b16 %v1566, %v1564
        %v1675 = vpack.c.b16 %v1567, %v1565
        %v1676 = vpack.c.b16 %v1570, %v1568
        %v1677 = vpack.c.b16 %v1571, %v1569
        %v1678 = vpack.c.b16 %v1574, %v1572
        %v1679 = vpack.c.b16 %v1575, %v1573
        %v1680 = vpack.c.b16 %v1578, %v1576
        %v1681 = vpack.c.b16 %v1579, %v1577
        %v1682 = vpack.c.b16 %v1582, %v1580
        %v1683 = vpack.c.b16 %v1583, %v1581
        %v1684 = vpack.c.b16 %v1586, %v1584
        %v1685 = vpack.c.b16 %v1587, %v1585
        %v1686 = vpack.c.b16 %v1590, %v1588
        %v1687 = vpack.c.b16 %v1591, %v1589
        %v1688 = vpack.c.b16 %v1594, %v1592
        %v1689 = vpack.c.b16 %v1595, %v1593
        %v1690 = vpack.c.b16 %v1598, %v1596
        %v1691 = vpack.c.b16 %v1599, %v1597
        %v1692 = vpack.c.b16 %v1602, %v1600
        %v1693 = vpack.c.b16 %v1603, %v1601
        %v1694 = vpack.c.b16 %v1606, %v1604
        %v1695 = vpack.c.b16 %v1607, %v1605
        %v1696 = vpack.c.b16 %v1610, %v1608
        %v1697 = vpack.c.b16 %v1611, %v1609
        %v1698 = vpack.c.b16 %v1614, %v1612
        %v1699 = vpack.c.b16 %v1615, %v1613
        %v1700 = vpack.c.b16 %v1618, %v1616
        %v1701 = vpack.c.b16 %v1619, %v1617
        %v1702 = vpack.c.b16 %v1622, %v1620
        %v1703 = vpack.c.b16 %v1623, %v1621
        %1784 = vmatpush.bf16.msra.mxu0 %v1638
        %1785 = vmatpush.bf16.msra.mxu0 %v1636
        %1786 = vmatpush.bf16.msra.mxu0 %v1634
        %1787 = vmatpush.bf16.msra.mxu0 %v1632
        %1788 = vmatpush.bf16.msra.mxu0 %v1630
        %1789 = vmatpush.bf16.msra.mxu0 %v1628
        %1790 = vmatpush.bf16.msra.mxu0 %v1626
        %1791 = vmatpush.bf16.msra.mxu0 %v1624
        %1792 = vmatmul.bf16.gmra.mxu0 %v1379
        %v1793 = vpop.f32.mrf.mxu0
        %v1794 = vadd.f32 0.0, %v1793
        %v1795 = vpop.f32.mrf.mxu0
        %v1796 = vadd.f32 0.0, %v1795
        %1797 = vdwg.mxu0
        %1798 = vmatpush.bf16.msra.mxu0 %v1654
        %1799 = vmatpush.bf16.msra.mxu0 %v1652
        %1800 = vmatpush.bf16.msra.mxu0 %v1650
        %1801 = vmatpush.bf16.msra.mxu0 %v1648
        %1802 = vmatpush.bf16.msra.mxu0 %v1646
        %1803 = vmatpush.bf16.msra.mxu0 %v1644
        %1804 = vmatpush.bf16.msra.mxu0 %v1642
        %1805 = vmatpush.bf16.msra.mxu0 %v1640
        %1806 = vmatmul.bf16.gmra.mxu0 %v1380
        %v1807 = vpop.f32.mrf.mxu0
        %v1808 = vadd.f32 %v1794, %v1807
        %v1809 = vpop.f32.mrf.mxu0
        %v1810 = vadd.f32 %v1796, %v1809
        %1811 = vdwg.mxu0
        %1812 = vmatpush.bf16.msra.mxu0 %v1670
        %1813 = vmatpush.bf16.msra.mxu0 %v1668
        %1814 = vmatpush.bf16.msra.mxu0 %v1666
        %1815 = vmatpush.bf16.msra.mxu0 %v1664
        %1816 = vmatpush.bf16.msra.mxu0 %v1662
        %1817 = vmatpush.bf16.msra.mxu0 %v1660
        %1818 = vmatpush.bf16.msra.mxu0 %v1658
        %1819 = vmatpush.bf16.msra.mxu0 %v1656
        %1820 = vmatmul.bf16.gmra.mxu0 %v1381
        %v1821 = vpop.f32.mrf.mxu0
        %v1822 = vadd.f32 %v1808, %v1821
        %v1823 = vpop.f32.mrf.mxu0
        %v1824 = vadd.f32 %v1810, %v1823
        %1825 = vdwg.mxu0
        %1826 = vmatpush.bf16.msra.mxu0 %v1686
        %1827 = vmatpush.bf16.msra.mxu0 %v1684
        %1828 = vmatpush.bf16.msra.mxu0 %v1682
        %1829 = vmatpush.bf16.msra.mxu0 %v1680
        %1830 = vmatpush.bf16.msra.mxu0 %v1678
        %1831 = vmatpush.bf16.msra.mxu0 %v1676
        %1832 = vmatpush.bf16.msra.mxu0 %v1674
        %1833 = vmatpush.bf16.msra.mxu0 %v1672
        %1834 = vmatmul.bf16.gmra.mxu0 %v1382
        %v1835 = vpop.f32.mrf.mxu0
        %v1836 = vadd.f32 %v1822, %v1835
        %v1837 = vpop.f32.mrf.mxu0
        %v1838 = vadd.f32 %v1824, %v1837
        %1839 = vdwg.mxu0
        %1840 = vmatpush.bf16.msra.mxu0 %v1702
        %1841 = vmatpush.bf16.msra.mxu0 %v1700
        %1842 = vmatpush.bf16.msra.mxu0 %v1698
        %1843 = vmatpush.bf16.msra.mxu0 %v1696
        %1844 = vmatpush.bf16.msra.mxu0 %v1694
        %1845 = vmatpush.bf16.msra.mxu0 %v1692
        %1846 = vmatpush.bf16.msra.mxu0 %v1690
        %1847 = vmatpush.bf16.msra.mxu0 %v1688
        %1848 = vmatmul.bf16.gmra.mxu0 %v1383
        %v1849 = vpop.f32.mrf.mxu0
        %v1850 = vadd.f32 %v1836, %v1849
        %v1851 = vpop.f32.mrf.mxu0
        %v1852 = vadd.f32 %v1838, %v1851
        %1853 = vdwg.mxu0
        %1854 = vmatpush.bf16.msra.mxu0 %v1639
        %1855 = vmatpush.bf16.msra.mxu0 %v1637
        %1856 = vmatpush.bf16.msra.mxu0 %v1635
        %1857 = vmatpush.bf16.msra.mxu0 %v1633
        %1858 = vmatpush.bf16.msra.mxu0 %v1631
        %1859 = vmatpush.bf16.msra.mxu0 %v1629
        %1860 = vmatpush.bf16.msra.mxu0 %v1627
        %1861 = vmatpush.bf16.msra.mxu0 %v1625
        %1862 = vmatmul.bf16.gmra.mxu0 %v1379
        %v1863 = vpop.f32.mrf.mxu0
        %v1864 = vadd.f32 0.0, %v1863
        %v1865 = vpop.f32.mrf.mxu0
        %v1866 = vadd.f32 0.0, %v1865
        %1867 = vdwg.mxu0
        %1868 = vmatpush.bf16.msra.mxu0 %v1655
        %1869 = vmatpush.bf16.msra.mxu0 %v1653
        %1870 = vmatpush.bf16.msra.mxu0 %v1651
        %1871 = vmatpush.bf16.msra.mxu0 %v1649
        %1872 = vmatpush.bf16.msra.mxu0 %v1647
        %1873 = vmatpush.bf16.msra.mxu0 %v1645
        %1874 = vmatpush.bf16.msra.mxu0 %v1643
        %1875 = vmatpush.bf16.msra.mxu0 %v1641
        %1876 = vmatmul.bf16.gmra.mxu0 %v1380
        %v1877 = vpop.f32.mrf.mxu0
        %v1878 = vadd.f32 %v1864, %v1877
        %v1879 = vpop.f32.mrf.mxu0
        %v1880 = vadd.f32 %v1866, %v1879
        %1881 = vdwg.mxu0
        %1882 = vmatpush.bf16.msra.mxu0 %v1671
        %1883 = vmatpush.bf16.msra.mxu0 %v1669
        %1884 = vmatpush.bf16.msra.mxu0 %v1667
        %1885 = vmatpush.bf16.msra.mxu0 %v1665
        %1886 = vmatpush.bf16.msra.mxu0 %v1663
        %1887 = vmatpush.bf16.msra.mxu0 %v1661
        %1888 = vmatpush.bf16.msra.mxu0 %v1659
        %1889 = vmatpush.bf16.msra.mxu0 %v1657
        %1890 = vmatmul.bf16.gmra.mxu0 %v1381
        %v1891 = vpop.f32.mrf.mxu0
        %v1892 = vadd.f32 %v1878, %v1891
        %v1893 = vpop.f32.mrf.mxu0
        %v1894 = vadd.f32 %v1880, %v1893
        %1895 = vdwg.mxu0
        %1896 = vmatpush.bf16.msra.mxu0 %v1687
        %1897 = vmatpush.bf16.msra.mxu0 %v1685
        %1898 = vmatpush.bf16.msra.mxu0 %v1683
        %1899 = vmatpush.bf16.msra.mxu0 %v1681
        %1900 = vmatpush.bf16.msra.mxu0 %v1679
        %1901 = vmatpush.bf16.msra.mxu0 %v1677
        %1902 = vmatpush.bf16.msra.mxu0 %v1675
        %1903 = vmatpush.bf16.msra.mxu0 %v1673
        %1904 = vmatmul.bf16.gmra.mxu0 %v1382
        %v1905 = vpop.f32.mrf.mxu0
        %v1906 = vadd.f32 %v1892, %v1905
        %v1907 = vpop.f32.mrf.mxu0
        %v1908 = vadd.f32 %v1894, %v1907
        %1909 = vdwg.mxu0
        %1910 = vmatpush.bf16.msra.mxu0 %v1703
        %1911 = vmatpush.bf16.msra.mxu0 %v1701
        %1912 = vmatpush.bf16.msra.mxu0 %v1699
        %1913 = vmatpush.bf16.msra.mxu0 %v1697
        %1914 = vmatpush.bf16.msra.mxu0 %v1695
        %1915 = vmatpush.bf16.msra.mxu0 %v1693
        %1916 = vmatpush.bf16.msra.mxu0 %v1691
        %1917 = vmatpush.bf16.msra.mxu0 %v1689
        %1918 = vmatmul.bf16.gmra.mxu0 %v1383
        %v1919 = vpop.f32.mrf.mxu0
        %v1920 = vadd.f32 %v1906, %v1919
        %v1921 = vpop.f32.mrf.mxu0
        %v1922 = vadd.f32 %v1908, %v1921
        %1923 = vdwg.mxu0
        %v1924 = vmax.f32 %v1850, %v1920
        %v1925 = vmax.f32 %v1852, %v1922
        %v1927 = vrot.slane %v1924, 1
        %v1929 = vrot.slane %v1924, 2
        %v1931 = vrot.slane %v1924, 3
        %v1934 = vrot.slane %v1925, 4
        %vm1936 = vcmask 1040384
        %v1937 = vsel %vm1936, %v1924, %v1927
        %vm1938 = vcmask 1041408
        %v1939 = vsel %vm1938, %v1937, %v1929
        %vm1940 = vcmask 1042432
        %v1941 = vsel %vm1940, %v1939, %v1931
        %v1942 = vsel %vm1373, %v1941, %v1934
        %v1943 = vrot.slane %v1924, 4
        %v1945 = vrot.slane %v1925, 5
        %v1947 = vsel %vm1936, %v1927, %v1929
        %v1948 = vsel %vm1938, %v1947, %v1931
        %v1949 = vsel %vm1940, %v1948, %v1943
        %v1950 = vsel %vm1373, %v1949, %v1945
        %v1951 = vmax.f32 %v1942, %v1950
        %v1952 = vld [vmem:[%s5] sm:$0x1]
        %v1954 = vperm.slane %v1952, 0
        %v1956 = vadd.f32 %v1951, %v1954
        %v1957 = vmax.f32 %v1956, 0.0
        %v1959 = vrot.slane %v1957, 1
        %v1961 = vrot.slane %v1957, 2
        %v1963 = vrot.slane %v1957, 3
        %v1965 = vrot.slane %v1957, 4
        %v1967 = vpack.c.bf16 %v1957, %v1957
        %v1968 = vpack.c.bf16 %v1959, %v1959
        %v1969 = vpack.c.bf16 %v1961, %v1961
        %v1970 = vpack.c.bf16 %v1963, %v1963
        %v1971 = vpack.c.bf16 %v1965, %v1965
        %v1972 = vld [vmem:[%s6] sm:$0xf]
        %v1973 = vld [vmem:[%s6 + $0x4] sm:$0xf]
        %v1974 = vld [vmem:[%s6 + $0x8] sm:$0xf]
        %v1975 = vld [vmem:[%s6 + $0xc] sm:$0xf]
        %v1976 = vld [vmem:[%s6 + $0x10] sm:$0xf]
        %v1977 = vld [vmem:[%s6 + $0x14] sm:$0xf]
        %v1978 = vld [vmem:[%s6 + $0x18] sm:$0xf]
        %v1979 = vld [vmem:[%s6 + $0x1c] sm:$0xf]
        %v1980 = vld [vmem:[%s6 + $0x20] sm:$0xf]
        %v1981 = vld [vmem:[%s6 + $0x24] sm:$0xf]
        %v1982 = vld [vmem:[%s6 + $0x28] sm:$0xf]
        %v1983 = vld [vmem:[%s6 + $0x2c] sm:$0xf]
        %v1984 = vld [vmem:[%s6 + $0x30] sm:$0xf]
        %v1985 = vld [vmem:[%s6 + $0x34] sm:$0xf]
        %v1986 = vld [vmem:[%s6 + $0x38] sm:$0xf]
        %v1987 = vld [vmem:[%s6 + $0x3c] sm:$0xf]
        %v1988 = vld [vmem:[%s6 + $0x40] sm:$0xf]
        %v1989 = vld [vmem:[%s6 + $0x44] sm:$0xf]
        %v1990 = vld [vmem:[%s6 + $0x48] sm:$0xf]
        %v1991 = vld [vmem:[%s6 + $0x4c] sm:$0xf]
        %v1992 = vld [vmem:[%s6 + $0x50] sm:$0xf]
        %v1993 = vld [vmem:[%s6 + $0x54] sm:$0xf]
        %v1994 = vld [vmem:[%s6 + $0x58] sm:$0xf]
        %v1995 = vld [vmem:[%s6 + $0x5c] sm:$0xf]
        %v1996 = vld [vmem:[%s6 + $0x60] sm:$0xf]
        %v1997 = vld [vmem:[%s6 + $0x64] sm:$0xf]
        %v1998 = vld [vmem:[%s6 + $0x68] sm:$0xf]
        %v1999 = vld [vmem:[%s6 + $0x6c] sm:$0xf]
        %v2000 = vld [vmem:[%s6 + $0x70] sm:$0xf]
        %v2001 = vld [vmem:[%s6 + $0x74] sm:$0xf]
        %v2002 = vld [vmem:[%s6 + $0x78] sm:$0xf]
        %v2003 = vld [vmem:[%s6 + $0x7c] sm:$0xf]
        %v2004 = vld [vmem:[%s6 + $0x80] sm:$0xf]
        %v2005 = vld [vmem:[%s6 + $0x84] sm:$0xf]
        %v2006 = vld [vmem:[%s6 + $0x88] sm:$0xf]
        %v2007 = vld [vmem:[%s6 + $0x8c] sm:$0xf]
        %v2008 = vld [vmem:[%s6 + $0x90] sm:$0xf]
        %v2009 = vld [vmem:[%s6 + $0x94] sm:$0xf]
        %v2010 = vld [vmem:[%s6 + $0x98] sm:$0xf]
        %v2011 = vld [vmem:[%s6 + $0x9c] sm:$0xf]
        %v2012 = vld [vmem:[%s6 + $0xa0] sm:$0xf]
        %v2013 = vld [vmem:[%s6 + $0xa4] sm:$0xf]
        %v2014 = vld [vmem:[%s6 + $0xa8] sm:$0xf]
        %v2015 = vld [vmem:[%s6 + $0xac] sm:$0xf]
        %v2016 = vld [vmem:[%s6 + $0xb0] sm:$0xf]
        %v2017 = vld [vmem:[%s6 + $0xb4] sm:$0xf]
        %v2018 = vld [vmem:[%s6 + $0xb8] sm:$0xf]
        %v2019 = vld [vmem:[%s6 + $0xbc] sm:$0xf]
        %v2020 = vld [vmem:[%s6 + $0xc0] sm:$0xf]
        %v2021 = vld [vmem:[%s6 + $0xc4] sm:$0xf]
        %v2022 = vld [vmem:[%s6 + $0xc8] sm:$0xf]
        %v2023 = vld [vmem:[%s6 + $0xcc] sm:$0xf]
        %v2024 = vld [vmem:[%s6 + $0xd0] sm:$0xf]
        %v2025 = vld [vmem:[%s6 + $0xd4] sm:$0xf]
        %v2026 = vld [vmem:[%s6 + $0xd8] sm:$0xf]
        %v2027 = vld [vmem:[%s6 + $0xdc] sm:$0xf]
        %v2028 = vld [vmem:[%s6 + $0xe0] sm:$0xf]
        %v2029 = vld [vmem:[%s6 + $0xe4] sm:$0xf]
        %v2030 = vld [vmem:[%s6 + $0xe8] sm:$0xf]
        %v2031 = vld [vmem:[%s6 + $0xec] sm:$0xf]
        %v2032 = vld [vmem:[%s6 + $0xf0] sm:$0xf]
        %v2033 = vld [vmem:[%s6 + $0xf4] sm:$0xf]
        %v2034 = vld [vmem:[%s6 + $0xf8] sm:$0xf]
        %v2035 = vld [vmem:[%s6 + $0xfc] sm:$0xf]
        %v2036 = vld [vmem:[%s6 + $0x100] sm:$0xf]
        %v2037 = vld [vmem:[%s6 + $0x104] sm:$0xf]
        %v2038 = vld [vmem:[%s6 + $0x108] sm:$0xf]
        %v2039 = vld [vmem:[%s6 + $0x10c] sm:$0xf]
        %v2040 = vld [vmem:[%s6 + $0x110] sm:$0xf]
        %v2041 = vld [vmem:[%s6 + $0x114] sm:$0xf]
        %v2042 = vld [vmem:[%s6 + $0x118] sm:$0xf]
        %v2043 = vld [vmem:[%s6 + $0x11c] sm:$0xf]
        %v2044 = vld [vmem:[%s6 + $0x120] sm:$0xf]
        %v2045 = vld [vmem:[%s6 + $0x124] sm:$0xf]
        %v2046 = vld [vmem:[%s6 + $0x128] sm:$0xf]
        %v2047 = vld [vmem:[%s6 + $0x12c] sm:$0xf]
        %v2048 = vld [vmem:[%s6 + $0x130] sm:$0xf]
        %v2049 = vld [vmem:[%s6 + $0x134] sm:$0xf]
        %v2050 = vld [vmem:[%s6 + $0x138] sm:$0xf]
        %v2051 = vld [vmem:[%s6 + $0x13c] sm:$0xf]
        %v2052 = vld [vmem:[%s7] sm:$0x1]
        %v2133 = vunpack.c.l.b16 %v1972
        %v2134 = vunpack.c.l.b16 %v1973
        %v2135 = vunpack.c.l.b16 %v1974
        %v2136 = vunpack.c.l.b16 %v1975
        %v2137 = vunpack.c.l.b16 %v1976
        %v2138 = vunpack.c.l.b16 %v1977
        %v2139 = vunpack.c.l.b16 %v1978
        %v2140 = vunpack.c.l.b16 %v1979
        %v2141 = vunpack.c.l.b16 %v1980
        %v2142 = vunpack.c.l.b16 %v1981
        %v2143 = vunpack.c.l.b16 %v1982
        %v2144 = vunpack.c.l.b16 %v1983
        %v2145 = vunpack.c.l.b16 %v1984
        %v2146 = vunpack.c.l.b16 %v1985
        %v2147 = vunpack.c.l.b16 %v1986
        %v2148 = vunpack.c.l.b16 %v1987
        %v2149 = vunpack.c.l.b16 %v1988
        %v2150 = vunpack.c.l.b16 %v1989
        %v2151 = vunpack.c.l.b16 %v1990
        %v2152 = vunpack.c.l.b16 %v1991
        %v2153 = vunpack.c.l.b16 %v1992
        %v2154 = vunpack.c.l.b16 %v1993
        %v2155 = vunpack.c.l.b16 %v1994
        %v2156 = vunpack.c.l.b16 %v1995
        %v2157 = vunpack.c.l.b16 %v1996
        %v2158 = vunpack.c.l.b16 %v1997
        %v2159 = vunpack.c.l.b16 %v1998
        %v2160 = vunpack.c.l.b16 %v1999
        %v2161 = vunpack.c.l.b16 %v2000
        %v2162 = vunpack.c.l.b16 %v2001
        %v2163 = vunpack.c.l.b16 %v2002
        %v2164 = vunpack.c.l.b16 %v2003
        %v2165 = vunpack.c.l.b16 %v2004
        %v2166 = vunpack.c.l.b16 %v2005
        %v2167 = vunpack.c.l.b16 %v2006
        %v2168 = vunpack.c.l.b16 %v2007
        %v2169 = vunpack.c.l.b16 %v2008
        %v2170 = vunpack.c.l.b16 %v2009
        %v2171 = vunpack.c.l.b16 %v2010
        %v2172 = vunpack.c.l.b16 %v2011
        %v2173 = vunpack.c.l.b16 %v2012
        %v2174 = vunpack.c.l.b16 %v2013
        %v2175 = vunpack.c.l.b16 %v2014
        %v2176 = vunpack.c.l.b16 %v2015
        %v2177 = vunpack.c.l.b16 %v2016
        %v2178 = vunpack.c.l.b16 %v2017
        %v2179 = vunpack.c.l.b16 %v2018
        %v2180 = vunpack.c.l.b16 %v2019
        %v2181 = vunpack.c.l.b16 %v2020
        %v2182 = vunpack.c.l.b16 %v2021
        %v2183 = vunpack.c.l.b16 %v2022
        %v2184 = vunpack.c.l.b16 %v2023
        %v2185 = vunpack.c.l.b16 %v2024
        %v2186 = vunpack.c.l.b16 %v2025
        %v2187 = vunpack.c.l.b16 %v2026
        %v2188 = vunpack.c.l.b16 %v2027
        %v2189 = vunpack.c.l.b16 %v2028
        %v2190 = vunpack.c.l.b16 %v2029
        %v2191 = vunpack.c.l.b16 %v2030
        %v2192 = vunpack.c.l.b16 %v2031
        %v2193 = vunpack.c.l.b16 %v2032
        %v2194 = vunpack.c.l.b16 %v2033
        %v2195 = vunpack.c.l.b16 %v2034
        %v2196 = vunpack.c.l.b16 %v2035
        %v2197 = vunpack.c.l.b16 %v2036
        %v2198 = vunpack.c.l.b16 %v2037
        %v2199 = vunpack.c.l.b16 %v2038
        %v2200 = vunpack.c.l.b16 %v2039
        %v2201 = vunpack.c.l.b16 %v2040
        %v2202 = vunpack.c.l.b16 %v2041
        %v2203 = vunpack.c.l.b16 %v2042
        %v2204 = vunpack.c.l.b16 %v2043
        %v2205 = vunpack.c.l.b16 %v2044
        %v2206 = vunpack.c.l.b16 %v2045
        %v2207 = vunpack.c.l.b16 %v2046
        %v2208 = vunpack.c.l.b16 %v2047
        %v2209 = vunpack.c.l.b16 %v2048
        %v2210 = vunpack.c.l.b16 %v2049
        %v2211 = vunpack.c.l.b16 %v2050
        %v2212 = vunpack.c.l.b16 %v2051
        %v2213 = vpack.c.b16 %v2134, %v2133
        %v2214 = vpack.c.b16 %v2136, %v2135
        %v2215 = vpack.c.b16 %v2138, %v2137
        %v2216 = vpack.c.b16 %v2140, %v2139
        %v2217 = vpack.c.b16 %v2142, %v2141
        %v2218 = vpack.c.b16 %v2144, %v2143
        %v2219 = vpack.c.b16 %v2146, %v2145
        %v2220 = vpack.c.b16 %v2148, %v2147
        %v2221 = vpack.c.b16 %v2150, %v2149
        %v2222 = vpack.c.b16 %v2152, %v2151
        %v2223 = vpack.c.b16 %v2154, %v2153
        %v2224 = vpack.c.b16 %v2156, %v2155
        %v2225 = vpack.c.b16 %v2158, %v2157
        %v2226 = vpack.c.b16 %v2160, %v2159
        %v2227 = vpack.c.b16 %v2162, %v2161
        %v2228 = vpack.c.b16 %v2164, %v2163
        %v2229 = vpack.c.b16 %v2166, %v2165
        %v2230 = vpack.c.b16 %v2168, %v2167
        %v2231 = vpack.c.b16 %v2170, %v2169
        %v2232 = vpack.c.b16 %v2172, %v2171
        %v2233 = vpack.c.b16 %v2174, %v2173
        %v2234 = vpack.c.b16 %v2176, %v2175
        %v2235 = vpack.c.b16 %v2178, %v2177
        %v2236 = vpack.c.b16 %v2180, %v2179
        %v2237 = vpack.c.b16 %v2182, %v2181
        %v2238 = vpack.c.b16 %v2184, %v2183
        %v2239 = vpack.c.b16 %v2186, %v2185
        %v2240 = vpack.c.b16 %v2188, %v2187
        %v2241 = vpack.c.b16 %v2190, %v2189
        %v2242 = vpack.c.b16 %v2192, %v2191
        %v2243 = vpack.c.b16 %v2194, %v2193
        %v2244 = vpack.c.b16 %v2196, %v2195
        %v2245 = vpack.c.b16 %v2198, %v2197
        %v2246 = vpack.c.b16 %v2200, %v2199
        %v2247 = vpack.c.b16 %v2202, %v2201
        %v2248 = vpack.c.b16 %v2204, %v2203
        %v2249 = vpack.c.b16 %v2206, %v2205
        %v2250 = vpack.c.b16 %v2208, %v2207
        %v2251 = vpack.c.b16 %v2210, %v2209
        %v2252 = vpack.c.b16 %v2212, %v2211
        %2293 = vmatpush.bf16.msra.mxu0 %v2220
        %2294 = vmatpush.bf16.msra.mxu0 %v2219
        %2295 = vmatpush.bf16.msra.mxu0 %v2218
        %2296 = vmatpush.bf16.msra.mxu0 %v2217
        %2297 = vmatpush.bf16.msra.mxu0 %v2216
        %2298 = vmatpush.bf16.msra.mxu0 %v2215
        %2299 = vmatpush.bf16.msra.mxu0 %v2214
        %2300 = vmatpush.bf16.msra.mxu0 %v2213
        %2301 = vmatmul.bf16.gmra.mxu0 %v1967
        %v2302 = vpop.f32.mrf.mxu0
        %v2303 = vadd.f32 %v2052, %v2302
        %v2304 = vpop.f32.mrf.mxu0
        %2305 = vdwg.mxu0
        %2306 = vmatpush.bf16.msra.mxu0 %v2228
        %2307 = vmatpush.bf16.msra.mxu0 %v2227
        %2308 = vmatpush.bf16.msra.mxu0 %v2226
        %2309 = vmatpush.bf16.msra.mxu0 %v2225
        %2310 = vmatpush.bf16.msra.mxu0 %v2224
        %2311 = vmatpush.bf16.msra.mxu0 %v2223
        %2312 = vmatpush.bf16.msra.mxu0 %v2222
        %2313 = vmatpush.bf16.msra.mxu0 %v2221
        %2314 = vmatmul.bf16.gmra.mxu0 %v1968
        %v2315 = vpop.f32.mrf.mxu0
        %v2316 = vadd.f32 %v2303, %v2315
        %v2317 = vpop.f32.mrf.mxu0
        %2318 = vdwg.mxu0
        %2319 = vmatpush.bf16.msra.mxu0 %v2236
        %2320 = vmatpush.bf16.msra.mxu0 %v2235
        %2321 = vmatpush.bf16.msra.mxu0 %v2234
        %2322 = vmatpush.bf16.msra.mxu0 %v2233
        %2323 = vmatpush.bf16.msra.mxu0 %v2232
        %2324 = vmatpush.bf16.msra.mxu0 %v2231
        %2325 = vmatpush.bf16.msra.mxu0 %v2230
        %2326 = vmatpush.bf16.msra.mxu0 %v2229
        %2327 = vmatmul.bf16.gmra.mxu0 %v1969
        %v2328 = vpop.f32.mrf.mxu0
        %v2329 = vadd.f32 %v2316, %v2328
        %v2330 = vpop.f32.mrf.mxu0
        %2331 = vdwg.mxu0
        %2332 = vmatpush.bf16.msra.mxu0 %v2244
        %2333 = vmatpush.bf16.msra.mxu0 %v2243
        %2334 = vmatpush.bf16.msra.mxu0 %v2242
        %2335 = vmatpush.bf16.msra.mxu0 %v2241
        %2336 = vmatpush.bf16.msra.mxu0 %v2240
        %2337 = vmatpush.bf16.msra.mxu0 %v2239
        %2338 = vmatpush.bf16.msra.mxu0 %v2238
        %2339 = vmatpush.bf16.msra.mxu0 %v2237
        %2340 = vmatmul.bf16.gmra.mxu0 %v1970
        %v2341 = vpop.f32.mrf.mxu0
        %v2342 = vadd.f32 %v2329, %v2341
        %v2343 = vpop.f32.mrf.mxu0
        %2344 = vdwg.mxu0
        %2345 = vmatpush.bf16.msra.mxu0 %v2252
        %2346 = vmatpush.bf16.msra.mxu0 %v2251
        %2347 = vmatpush.bf16.msra.mxu0 %v2250
        %2348 = vmatpush.bf16.msra.mxu0 %v2249
        %2349 = vmatpush.bf16.msra.mxu0 %v2248
        %2350 = vmatpush.bf16.msra.mxu0 %v2247
        %2351 = vmatpush.bf16.msra.mxu0 %v2246
        %2352 = vmatpush.bf16.msra.mxu0 %v2245
        %2353 = vmatmul.bf16.gmra.mxu0 %v1971
        %v2354 = vpop.f32.mrf.mxu0
        %v2355 = vadd.f32 %v2342, %v2354
        %v2356 = vpop.f32.mrf.mxu0
        %2357 = vdwg.mxu0
        %v2358 = vmax.f32 %v2355, 0.0
        %v2359 = vpack.c.bf16 %v2358, %v2358
        %v2360 = vld [vmem:[%s8] sm:$0xf]
        %v2361 = vld [vmem:[%s8 + $0x4] sm:$0xf]
        %v2362 = vld [vmem:[%s8 + $0x8] sm:$0xf]
        %v2363 = vld [vmem:[%s8 + $0xc] sm:$0xf]
        %v2364 = vld [vmem:[%s8 + $0x10] sm:$0xf]
        %v2365 = vld [vmem:[%s8 + $0x14] sm:$0xf]
        %v2366 = vld [vmem:[%s8 + $0x18] sm:$0xf]
        %v2367 = vld [vmem:[%s8 + $0x1c] sm:$0xf]
        %v2368 = vld [vmem:[%s8 + $0x20] sm:$0xf]
        %v2369 = vld [vmem:[%s8 + $0x24] sm:$0xf]
        %v2370 = vld [vmem:[%s8 + $0x28] sm:$0xf]
        %v2371 = vld [vmem:[%s8 + $0x2c] sm:$0xf]
        %v2372 = vld [vmem:[%s8 + $0x30] sm:$0xf]
        %v2373 = vld [vmem:[%s8 + $0x34] sm:$0xf]
        %v2374 = vld [vmem:[%s8 + $0x38] sm:$0xf]
        %v2375 = vld [vmem:[%s8 + $0x3c] sm:$0xf]
        %v2376 = vld [vmem:[%s9] sm:$0x1]
        %v2393 = vunpack.c.l.b16 %v2360
        %v2394 = vunpack.c.l.b16 %v2361
        %v2395 = vunpack.c.l.b16 %v2362
        %v2396 = vunpack.c.l.b16 %v2363
        %v2397 = vunpack.c.l.b16 %v2364
        %v2398 = vunpack.c.l.b16 %v2365
        %v2399 = vunpack.c.l.b16 %v2366
        %v2400 = vunpack.c.l.b16 %v2367
        %v2401 = vunpack.c.l.b16 %v2368
        %v2402 = vunpack.c.l.b16 %v2369
        %v2403 = vunpack.c.l.b16 %v2370
        %v2404 = vunpack.c.l.b16 %v2371
        %v2405 = vunpack.c.l.b16 %v2372
        %v2406 = vunpack.c.l.b16 %v2373
        %v2407 = vunpack.c.l.b16 %v2374
        %v2408 = vunpack.c.l.b16 %v2375
        %v2409 = vpack.c.b16 %v2394, %v2393
        %v2410 = vpack.c.b16 %v2396, %v2395
        %v2411 = vpack.c.b16 %v2398, %v2397
        %v2412 = vpack.c.b16 %v2400, %v2399
        %v2413 = vpack.c.b16 %v2402, %v2401
        %v2414 = vpack.c.b16 %v2404, %v2403
        %v2415 = vpack.c.b16 %v2406, %v2405
        %v2416 = vpack.c.b16 %v2408, %v2407
        %2425 = vmatpush.bf16.msra.mxu0 %v2416
        %2426 = vmatpush.bf16.msra.mxu0 %v2415
        %2427 = vmatpush.bf16.msra.mxu0 %v2414
        %2428 = vmatpush.bf16.msra.mxu0 %v2413
        %2429 = vmatpush.bf16.msra.mxu0 %v2412
        %2430 = vmatpush.bf16.msra.mxu0 %v2411
        %2431 = vmatpush.bf16.msra.mxu0 %v2410
        %2432 = vmatpush.bf16.msra.mxu0 %v2409
        %2433 = vmatmul.bf16.gmra.mxu0 %v2359
        %v2434 = vpop.f32.mrf.mxu0
        %v2435 = vadd.f32 %v2376, %v2434
        %v2436 = vpop.f32.mrf.mxu0
        %2437 = vdwg.mxu0
        %v2438 = vmax.f32 %v2435, 0.0
        %v2439 = vpack.c.bf16 %v2438, %v2438
        %v2440 = vld [vmem:[#allocation5] sm:$0xf]
        %v2441 = vld [vmem:[#allocation5 + $0x4] sm:$0xf]
        %v2442 = vld [vmem:[#allocation5 + $0x8] sm:$0xf]
        %v2443 = vld [vmem:[#allocation5 + $0xc] sm:$0xf]
        %v2444 = vld [vmem:[#allocation5 + $0x10] sm:$0xf]
        %v2445 = vld [vmem:[#allocation5 + $0x14] sm:$0xf]
        %v2446 = vld [vmem:[#allocation5 + $0x18] sm:$0xf]
        %v2447 = vld [vmem:[#allocation5 + $0x1c] sm:$0xf]
        %v2448 = vld [vmem:[#allocation5 + $0x20] sm:$0xf]
        %v2449 = vld [vmem:[#allocation5 + $0x24] sm:$0xf]
        %v2450 = vld [vmem:[#allocation5 + $0x28] sm:$0xf]
        %v2451 = vld [vmem:[#allocation5 + $0x2c] sm:$0xf]
        %v2452 = vld [vmem:[#allocation5 + $0x30] sm:$0xf]
        %v2453 = vld [vmem:[#allocation5 + $0x34] sm:$0xf]
        %v2454 = vld [vmem:[#allocation5 + $0x38] sm:$0xf]
        %v2455 = vld [vmem:[#allocation5 + $0x3c] sm:$0xf]
        %v2456 = vld [vmem:[%s11] sm:$0x1]
        %v2473 = vunpack.c.l.b16 %v2440
        %v2474 = vunpack.c.l.b16 %v2441
        %v2475 = vunpack.c.l.b16 %v2442
        %v2476 = vunpack.c.l.b16 %v2443
        %v2477 = vunpack.c.l.b16 %v2444
        %v2478 = vunpack.c.l.b16 %v2445
        %v2479 = vunpack.c.l.b16 %v2446
        %v2480 = vunpack.c.l.b16 %v2447
        %v2481 = vunpack.c.l.b16 %v2448
        %v2482 = vunpack.c.l.b16 %v2449
        %v2483 = vunpack.c.l.b16 %v2450
        %v2484 = vunpack.c.l.b16 %v2451
        %v2485 = vunpack.c.l.b16 %v2452
        %v2486 = vunpack.c.l.b16 %v2453
        %v2487 = vunpack.c.l.b16 %v2454
        %v2488 = vunpack.c.l.b16 %v2455
        %v2489 = vpack.c.b16 %v2474, %v2473
        %v2490 = vpack.c.b16 %v2476, %v2475
        %v2491 = vpack.c.b16 %v2478, %v2477
        %v2492 = vpack.c.b16 %v2480, %v2479
        %v2493 = vpack.c.b16 %v2482, %v2481
        %v2494 = vpack.c.b16 %v2484, %v2483
        %v2495 = vpack.c.b16 %v2486, %v2485
        %v2496 = vpack.c.b16 %v2488, %v2487
        %2505 = vmatpush.bf16.msra.mxu0 %v2496
        %2506 = vmatpush.bf16.msra.mxu0 %v2495
        %2507 = vmatpush.bf16.msra.mxu0 %v2494
        %2508 = vmatpush.bf16.msra.mxu0 %v2493
        %2509 = vmatpush.bf16.msra.mxu0 %v2492
        %2510 = vmatpush.bf16.msra.mxu0 %v2491
        %2511 = vmatpush.bf16.msra.mxu0 %v2490
        %2512 = vmatpush.bf16.msra.mxu0 %v2489
        %2513 = vmatmul.bf16.gmra.mxu0 %v2439
        %v2514 = vpop.f32.mrf.mxu0
        %v2515 = vadd.f32 %v2456, %v2514
        %v2516 = vpop.f32.mrf.mxu0
        %2517 = vdwg.mxu0
        %2518 = vst [vmem:[%s454] sm:$0x1] %v2515
        %s2519 = sand.u32 %s298, 1
        %s2520 = scalar_lea.sflag [#allocation4], %s2519
        %s2521 = sand.u32 %s298, 1
        %s2522 = scalar_lea.vmem [#allocation7], %s2521
        // Predicated region
        $region77: #{net_forward.1} parent=67 // pred_check
          %p2523 = pneg %p308
        $region78: #{net_forward.1} parent=67 // pred_check_branch
          %2525 = sbr.rel (%p2523) target = $region80
        $region79: #{net_forward.1} parent=67 // pred_region
          %2527 = vsyncadd %s2520, 0
          %s2528 = scalar_lea.hbm %s12, %s28
          %s2530 = sshll.u32 %s2522, 4
          %s2531 = int_to_ptr.vmem [resolvable:$true] %s2530
          %s2532 = sshll.u32 %s2528, 4
          %s2533 = int_to_ptr.hbm [resolvable:$true] %s2532
          %2535 = dma.vmem_to_hbm [thread:$0]  %s2531, 16, %s2533, %s2520
        $region80: #{net_forward.1} parent=67 // pred_fallthru
          _
      $region68: #{net_forward.1} parent=5 // pred_fallthru
        _
      %p2536 = scmp.le.s32.totalorder 2, %s23
      // Predicated region
      $region81: #{net_forward.1} parent=5 // pred_check
        %p2537 = pneg %p2536
      $region82: #{net_forward.1} parent=5 // pred_check_branch
        %2539 = sbr.rel (%p2537) target = $region84
      $region83: #{net_forward.1} parent=5 // pred_region
        %s2540 = ssub.s32 %s23, 2
        // Predicated region
        $region85: #{net_forward.1} parent=83 // pred_check
          %p2541 = pneg %p314
        $region86: #{net_forward.1} parent=83 // pred_check_branch
          %2543 = sbr.rel (%p2541) target = $region88
        $region87: #{net_forward.1} parent=83 // pred_region
          %s2544 = sand.u32 %s299, 1
          %s2545 = scalar_lea.sflag [#allocation4], %s2544
          %s2546 = sand.u32 %s299, 1
          %s2547 = scalar_lea.vmem [#allocation7], %s2546
          %2549 = dma.done %s2545, 16
        $region88: #{net_forward.1} parent=83 // pred_fallthru
          _
      $region84: #{net_forward.1} parent=5 // pred_fallthru
        _
    $region6: #{net_forward.1} parent=1 // loop_footer
      %s27 = sadd.s32 1, %s23
    $region7: #{net_forward.1} parent=1 // loop_footer_branch
      %22 = sbr.rel target = $region3
    $region8: #{net_forward.1} parent=1 // loop_exit
      _
    %2550 = vsyncpa [#allocation3], 1
    %s2551 = scalar_lea.sflag [#allocation3], 1
    %2552 = vsyncpa %s2551, 1
    %2553 = vsyncpa [#allocation6], 1
    %2554 = vsyncpa [#allocation4], 1
    %s2555 = scalar_lea.sflag [#allocation4], 1
    %2556 = vsyncpa %s2555, 1

</llo_original>
